<compile_context>
chip_gen: v5e
topology: v5e:2x2
jax: 0.10.0
libtpu: 0.0.40
codegen_flags: <defaults>
</compile_context>

<pallas_src>
import jax
import jax.numpy as jnp
from jax import lax
from jax.experimental import pallas as pl
from jax.experimental.pallas import tpu as pltpu

LANE = 128   # lane width
CK = 128     # contraction chunk size (lane-aligned)


def _round_up(x, m):
    return ((x + m - 1) // m) * m


# ----------------------------------------------------------------------------- kernel
def _make_kernel(KA, KD, KE):
    """KA / KD: #chunks of the (padded) audio / text encoder width; KE: #chunks of the
    (padded) embed dim.  Grid is (2 stages, KT=max(KA,KD,KE) chunks)."""
    bf16, f32 = jnp.bfloat16, jnp.float32

    def kernel(inv_temp_ref,                        # SMEM (1,1)  1/temp
               a_ref, t_ref,                        # VMEM [Bp, Da_p], [Bp, Dt_p]
               wa1_ref, sa1_ref, ba1_ref,           # audio_proj L1 (int8 W, f32 scale/bias)
               wa2_ref, sa2_ref, ba2_ref,           # audio_proj L2
               wt1_ref, st1_ref, bt1_ref,           # text_proj  L1
               wt2_ref, st2_ref, bt2_ref,           # text_proj  L2
               a2t_ref,                             # VMEM [Bp, Bp] f32
               acc_a, acc_t, hid_a, hid_t):         # scratch
        s = pl.program_id(0)
        k = pl.program_id(1)
        last_k = pl.num_programs(1) - 1

        def deq(w_ref):
            # int8 -> bf16 for the MXU; the per-column scale is applied later to the
            # small f32 accumulator (exactly equivalent to x @ (W_q * scale)).
            return w_ref[...].astype(f32).astype(bf16)

        @pl.when((s == 0) & (k == 0))
        def _init():
            acc_a[...] = jnp.zeros_like(acc_a)
            acc_t[...] = jnp.zeros_like(acc_t)

        # ---- stage 0: first Linear of each projection, chunked over encoder width ----
        @pl.when((s == 0) & (k < KA))
        def _a1():
            off = pl.multiple_of(k * CK, CK)
            x = a_ref[:, pl.ds(off, CK)].astype(bf16)
            acc_a[...] += jnp.dot(x, deq(wa1_ref), preferred_element_type=f32)

        @pl.when((s == 0) & (k < KD))
        def _t1():
            off = pl.multiple_of(k * CK, CK)
            x = t_ref[:, pl.ds(off, CK)].astype(bf16)
            acc_t[...] += jnp.dot(x, deq(wt1_ref), preferred_element_type=f32)

        # ---- stage 1, k == 0: finish L1 (col-scale + bias + ReLU), reset accumulators ----
        @pl.when((s == 1) & (k == 0))
        def _mid():
            hid_a[...] = jnp.maximum(acc_a[...] * sa1_ref[...] + ba1_ref[...], 0.0).astype(bf16)
            hid_t[...] = jnp.maximum(acc_t[...] * st1_ref[...] + bt1_ref[...], 0.0).astype(bf16)
            acc_a[...] = jnp.zeros_like(acc_a)
            acc_t[...] = jnp.zeros_like(acc_t)

        # ---- stage 1: second Linear, chunked over the embed dim ----
        @pl.when((s == 1) & (k < KE))
        def _a2():
            off = pl.multiple_of(k * CK, CK)
            acc_a[...] += jnp.dot(hid_a[:, pl.ds(off, CK)], deq(wa2_ref),
                                  preferred_element_type=f32)

        @pl.when((s == 1) & (k < KE))
        def _t2():
            off = pl.multiple_of(k * CK, CK)
            acc_t[...] += jnp.dot(hid_t[:, pl.ds(off, CK)], deq(wt2_ref),
                                  preferred_element_type=f32)

        # ---- stage 1, last step: bias, L2 normalize (rsqrt on EUP, 1/temp folded into
        # the audio scale), similarity matmul kept in f32 (tiny; avoids bf16 rounding
        # being amplified by 1/temp). ----
        @pl.when((s == 1) & (k == last_k))
        def _fin():
            ea = acc_a[...] * sa2_ref[...] + ba2_ref[...]
            et = acc_t[...] * st2_ref[...] + bt2_ref[...]
            eps2 = 1e-24  # (1e-12)^2: matches torch F.normalize clamp_min(||x||, eps)
            inv_na = lax.rsqrt(jnp.maximum(jnp.sum(ea * ea, axis=-1, keepdims=True), eps2))
            inv_nt = lax.rsqrt(jnp.maximum(jnp.sum(et * et, axis=-1, keepdims=True), eps2))
            na = ea * (inv_na * inv_temp_ref[0, 0])   # fold 1/temp into the (B,1) scale
            nt = et * inv_nt
            # Contract axis 1 of both operands (no transposed copy requested).
            # TODO(synk): for very large B, verify with pl.lower_as_mlir that Mosaic does
            # not materialize a transpose of nt; if it does, pre-transpose nt instead.
            sim = lax.dot_general(na, nt, dimension_numbers=(((1,), (1,)), ((), ())),
                                  preferred_element_type=f32)
            a2t_ref[...] = sim

    return kernel


# ------------------------------------------------------------------------- parameters
def init_params(key, audio_width, text_width, embed_size):
    """Logical (unpadded) f32 params. Weights stored [in, out] so y = x @ W + b
    matches nn.Linear with W = weight.T."""
    ks = jax.random.split(key, 8)

    def lin_w(k, fan_in, fan_out):
        bound = 1.0 / jnp.sqrt(fan_in)
        return jax.random.uniform(k, (fan_in, fan_out), jnp.float32, -bound, bound)

    def lin_b(k, fan_in, fan_out):
        bound = 1.0 / jnp.sqrt(fan_in)
        return jax.random.uniform(k, (1, fan_out), jnp.float32, -bound, bound)

    return {
        "wa1": lin_w(ks[0], audio_width, embed_size), "ba1": lin_b(ks[1], audio_width, embed_size),
        "wa2": lin_w(ks[2], embed_size, embed_size),  "ba2": lin_b(ks[3], embed_size, embed_size),
        "wt1": lin_w(ks[4], text_width, embed_size),  "bt1": lin_b(ks[5], text_width, embed_size),
        "wt2": lin_w(ks[6], embed_size, embed_size),  "bt2": lin_b(ks[7], embed_size, embed_size),
    }


def _quantize_cols(w):
    """Per-output-column symmetric int8 quantization; returns (int8 weights, f32 scales)."""
    absmax = jnp.max(jnp.abs(w), axis=0, keepdims=True)
    scale = jnp.maximum(absmax, 1e-30) / 127.0
    q = jnp.clip(jnp.round(w / scale), -127.0, 127.0).astype(jnp.int8)
    return q, scale.astype(jnp.float32)


def prepare_params(params):
    """Zero-pad feature dims to 128-lane multiples (exactly semantics preserving: padded
    columns stay 0 through ReLU / second Linear / L2 norm / similarity) and quantize the
    four weight matrices to int8 with per-output-column f32 scales (halves weight DMA
    bytes — the roofline for this kernel)."""
    def pad_w(w):
        r, c = w.shape
        return jnp.pad(w, ((0, _round_up(r, LANE) - r), (0, _round_up(c, LANE) - c)))

    def pad_b(b):
        c = b.shape[-1]
        return jnp.pad(b.reshape(1, -1), ((0, 0), (0, _round_up(c, LANE) - c)))

    out = {}
    for name in ("wa1", "wa2", "wt1", "wt2"):
        q, s = _quantize_cols(pad_w(params[name]))
        out[name] = q
        out["s" + name[1:]] = s          # sa1, sa2, st1, st2
    for name in ("ba1", "ba2", "bt1", "bt2"):
        out[name] = pad_b(params[name])
    return out


# ---------------------------------------------------------------------------- wrapper
def ase_forward(audio_feats, text_feats, qparams, temp):
    """audio_feats: [B, Sa, Da] last_hidden_state; text_feats: [B, St, Dt]."""
    B, _, Da = audio_feats.shape
    _, _, Dt = text_feats.shape
    Da_p, Ep = qparams["wa1"].shape
    Dt_p = qparams["wt1"].shape[0]

    # CLS token + batch/feature padding (sublane/lane friendly). Padded batch rows
    # produce well-defined junk logits which are sliced off below.
    Bp = _round_up(max(B, 8), 8)
    a_cls = jnp.pad(audio_feats[:, 0, :], ((0, Bp - B), (0, Da_p - Da)))
    t_cls = jnp.pad(text_feats[:, 0, :], ((0, Bp - B), (0, Dt_p - Dt)))
    inv_temp = jnp.reshape(1.0 / jnp.asarray(temp, jnp.float32), (1, 1))

    KA, KD, KE = Da_p // CK, Dt_p // CK, Ep // CK
    KT = max(KA, KD, KE)

    # Weight block index maps: each weight is streamed exactly once across the grid and
    # held (same block index -> no re-fetch) outside its stage; the first block of the
    # stage-1 weights is prefetched for free during stage 0.
    wa1_spec = pl.BlockSpec((CK, Ep), lambda s, k: (jnp.minimum(k + s * KT, KA - 1), 0))
    wt1_spec = pl.BlockSpec((CK, Ep), lambda s, k: (jnp.minimum(k + s * KT, KD - 1), 0))
    w2_spec = pl.BlockSpec((CK, Ep), lambda s, k: (jnp.minimum(k * s, KE - 1), 0))

    vmem = pl.BlockSpec(memory_space=pltpu.MemorySpace.VMEM)
    smem = pl.BlockSpec(memory_space=pltpu.MemorySpace.SMEM)
    a_spec = pl.BlockSpec((Bp, Da_p), lambda s, k: (0, 0))
    t_spec = pl.BlockSpec((Bp, Dt_p), lambda s, k: (0, 0))
    out_spec = pl.BlockSpec((Bp, Bp), lambda s, k: (0, 0))

    # Explicit VMEM budget (v5e scoped default is 16 MiB): double-buffered weight blocks
    # + resident activations / vectors / output / scratch, plus headroom.
    wblk = CK * Ep                                      # int8 bytes per weight block
    vmem_bytes = (4 * 2 * wblk
                  + 2 * (Bp * Da_p + Bp * Dt_p) * 4     # CLS inputs
                  + 2 * 8 * Ep * 4                      # scales + biases
                  + 2 * Bp * Bp * 4                     # output
                  + 2 * Bp * Ep * 4 + 2 * Bp * Ep * 2)  # f32 accumulators + bf16 hidden
    vmem_limit = min(vmem_bytes + (16 << 20), 100 << 20)

    sim = pl.pallas_call(
        _make_kernel(KA, KD, KE),
        out_shape=jax.ShapeDtypeStruct((Bp, Bp), jnp.float32),
        grid=(2, KT),
        in_specs=[smem, a_spec, t_spec,
                  wa1_spec, vmem, vmem, w2_spec, vmem, vmem,
                  wt1_spec, vmem, vmem, w2_spec, vmem, vmem],
        out_specs=out_spec,
        scratch_shapes=[pltpu.VMEM((Bp, Ep), jnp.float32),
                        pltpu.VMEM((Bp, Ep), jnp.float32),
                        pltpu.VMEM((Bp, Ep), jnp.bfloat16),
                        pltpu.VMEM((Bp, Ep), jnp.bfloat16)],
        compiler_params=pltpu.CompilerParams(
            dimension_semantics=("arbitrary", "arbitrary"),
            vmem_limit_bytes=vmem_limit),
    )(inv_temp, a_cls, t_cls,
      qparams["wa1"], qparams["sa1"], qparams["ba1"],
      qparams["wa2"], qparams["sa2"], qparams["ba2"],
      qparams["wt1"], qparams["st1"], qparams["bt1"],
      qparams["wt2"], qparams["st2"], qparams["bt2"])

    sim_a2t = sim[:B, :B]
    # sim_t2a == sim_a2t.T exactly (same temperature): no second MXU matmul needed.
    return sim_a2t, sim_a2t.T


# -------------------------------------------------------------------------- reference
def ase_reference(audio_feats, text_feats, params, temp):
    """Plain-JAX f32 reference matching the PyTorch module."""
    a = audio_feats[:, 0, :]
    t = text_feats[:, 0, :]
    ea = jnp.maximum(a @ params["wa1"] + params["ba1"], 0.0) @ params["wa2"] + params["ba2"]
    et = jnp.maximum(t @ params["wt1"] + params["bt1"], 0.0) @ params["wt2"] + params["bt2"]
    na = ea / jnp.maximum(jnp.linalg.norm(ea, axis=-1, keepdims=True), 1e-12)
    nt = et / jnp.maximum(jnp.linalg.norm(et, axis=-1, keepdims=True), 1e-12)
    return na @ nt.T / temp, nt @ na.T / temp


if __name__ == "__main__":
    key = jax.random.PRNGKey(0)
    k_a, k_t, k_p = jax.random.split(key, 3)

    # Small but structured shapes (real HTSAT/BERT hidden width is 768 = 6*128).
    B, Sa, St = 4, 8, 8
    audio_width, text_width, embed_size = 256, 128, 64
    temp = 0.07

    audio_feats = jax.random.normal(k_a, (B, Sa, audio_width), jnp.float32)
    text_feats = jax.random.normal(k_t, (B, St, text_width), jnp.float32)

    params = init_params(k_p, audio_width, text_width, embed_size)
    qparams = prepare_params(params)

    sim_a2t, sim_t2a = ase_forward(audio_feats, text_feats, qparams, temp)
    jax.block_until_ready((sim_a2t, sim_t2a))

    assert sim_a2t.shape == (B, B) and sim_t2a.shape == (B, B)

    ref_a2t, ref_t2a = ase_reference(audio_feats, text_feats, params, temp)
    err_a2t = float(jnp.max(jnp.abs(sim_a2t - ref_a2t)))
    err_t2a = float(jnp.max(jnp.abs(sim_t2a - ref_t2a)))
    # int8 weights + bf16 activations vs f32 reference at logit scale 1/temp ~= 14.3;
    # the similarity matmul itself is f32, so the error stays well below this bound.
    assert err_a2t < 0.25 and err_t2a < 0.25, (err_a2t, err_t2a)

    print("KERNEL_OK")
</pallas_src>

<mosaic_0001>
module attributes {stable_mosaic.version = 11 : i64} {
  func.func @kernel(%arg0: i32, %arg1: i32, %arg2: memref<1x1xf32, #tpu.memory_space<smem>>, %arg3: memref<8x256xf32, #tpu.memory_space<vmem>>, %arg4: memref<8x128xf32, #tpu.memory_space<vmem>>, %arg5: memref<128x128xi8, #tpu.memory_space<vmem>>, %arg6: memref<1x128xf32, #tpu.memory_space<vmem>>, %arg7: memref<1x128xf32, #tpu.memory_space<vmem>>, %arg8: memref<128x128xi8, #tpu.memory_space<vmem>>, %arg9: memref<1x128xf32, #tpu.memory_space<vmem>>, %arg10: memref<1x128xf32, #tpu.memory_space<vmem>>, %arg11: memref<128x128xi8, #tpu.memory_space<vmem>>, %arg12: memref<1x128xf32, #tpu.memory_space<vmem>>, %arg13: memref<1x128xf32, #tpu.memory_space<vmem>>, %arg14: memref<128x128xi8, #tpu.memory_space<vmem>>, %arg15: memref<1x128xf32, #tpu.memory_space<vmem>>, %arg16: memref<1x128xf32, #tpu.memory_space<vmem>>, %arg17: memref<8x8xf32, #tpu.memory_space<vmem>>, %arg18: memref<8x128xf32, #tpu.memory_space<vmem>>, %arg19: memref<8x128xf32, #tpu.memory_space<vmem>>, %arg20: memref<8x128xbf16, #tpu.memory_space<vmem>>, %arg21: memref<8x128xbf16, #tpu.memory_space<vmem>>) attributes {dimension_semantics = [#tpu.dimension_semantics<arbitrary>, #tpu.dimension_semantics<arbitrary>], iteration_bounds = array<i64: 2, 2>, scalar_prefetch = 0 : i64, scratch_operands = 4 : i64, tpu.core_type = #tpu.core_type<tc>, window_params = [{transform_indices = @transform_0, window_bounds = array<i64: 1, 1>}, {pipeline_mode = #tpu.pipeline_mode<synchronous>, transform_indices = @transform_1, window_bounds = array<i64: 8, 256>}, {pipeline_mode = #tpu.pipeline_mode<synchronous>, transform_indices = @transform_2, window_bounds = array<i64: 8, 128>}, {transform_indices = @transform_3, window_bounds = array<i64: 128, 128>}, {pipeline_mode = #tpu.pipeline_mode<synchronous>, transform_indices = @transform_4, window_bounds = array<i64: 1, 128>}, {pipeline_mode = #tpu.pipeline_mode<synchronous>, transform_indices = @transform_5, window_bounds = array<i64: 1, 128>}, {transform_indices = @transform_6, window_bounds = array<i64: 128, 128>}, {pipeline_mode = #tpu.pipeline_mode<synchronous>, transform_indices = @transform_7, window_bounds = array<i64: 1, 128>}, {pipeline_mode = #tpu.pipeline_mode<synchronous>, transform_indices = @transform_8, window_bounds = array<i64: 1, 128>}, {transform_indices = @transform_9, window_bounds = array<i64: 128, 128>}, {pipeline_mode = #tpu.pipeline_mode<synchronous>, transform_indices = @transform_10, window_bounds = array<i64: 1, 128>}, {pipeline_mode = #tpu.pipeline_mode<synchronous>, transform_indices = @transform_11, window_bounds = array<i64: 1, 128>}, {transform_indices = @transform_12, window_bounds = array<i64: 128, 128>}, {pipeline_mode = #tpu.pipeline_mode<synchronous>, transform_indices = @transform_13, window_bounds = array<i64: 1, 128>}, {pipeline_mode = #tpu.pipeline_mode<synchronous>, transform_indices = @transform_14, window_bounds = array<i64: 1, 128>}, {pipeline_mode = #tpu.pipeline_mode<synchronous>, transform_indices = @transform_15, window_bounds = array<i64: 8, 8>}]} {
    %c0_i32 = arith.constant 0 : i32
    %0 = arith.cmpi eq, %arg0, %c0_i32 : i32
    %c0_i32_0 = arith.constant 0 : i32
    %1 = arith.cmpi eq, %arg1, %c0_i32_0 : i32
    %2 = arith.andi %0, %1 : i1
    %3 = arith.extui %2 : i1 to i32
    %c0_i32_1 = arith.constant 0 : i32
    %4 = arith.cmpi ne, %3, %c0_i32_1 : i32
    scf.if %4 {
      %cst = arith.constant 0.000000e+00 : f32
      %35 = vector.broadcast %cst : f32 to vector<8x128xf32>
      %c0 = arith.constant 0 : index
      %c0_18 = arith.constant 0 : index
      %36 = vector.load %arg18[%c0, %c0_18] : memref<8x128xf32, #tpu.memory_space<vmem>>, vector<8x128xf32>
      tpu.vector_store %arg18[%c0, %c0_18], %35 {strides = array<i32>} : memref<8x128xf32, #tpu.memory_space<vmem>>, vector<8x128xf32>,
      %cst_19 = arith.constant 0.000000e+00 : f32
      %37 = vector.broadcast %cst_19 : f32 to vector<8x128xf32>
      %c0_20 = arith.constant 0 : index
      %c0_21 = arith.constant 0 : index
      %38 = vector.load %arg19[%c0_20, %c0_21] : memref<8x128xf32, #tpu.memory_space<vmem>>, vector<8x128xf32>
      tpu.vector_store %arg19[%c0_20, %c0_21], %37 {strides = array<i32>} : memref<8x128xf32, #tpu.memory_space<vmem>>, vector<8x128xf32>,
    } else {
    }
    %c0_i32_2 = arith.constant 0 : i32
    %5 = arith.cmpi eq, %arg0, %c0_i32_2 : i32
    %c2_i32 = arith.constant 2 : i32
    %6 = arith.cmpi slt, %arg1, %c2_i32 : i32
    %7 = arith.andi %5, %6 : i1
    %8 = arith.extui %7 : i1 to i32
    %c0_i32_3 = arith.constant 0 : i32
    %9 = arith.cmpi ne, %8, %c0_i32_3 : i32
    scf.if %9 {
      %c128_i32 = arith.constant 128 : i32
      %35 = arith.muli %arg1, %c128_i32 : i32
      %36 = tpu.assume_multiple %35, 128 : i32
      %c0 = arith.constant 0 : index
      %37 = arith.index_cast %36 : i32 to index
      %38 = vector.load %arg3[%c0, %37] : memref<8x256xf32, #tpu.memory_space<vmem>>, vector<8x128xf32>
      %39 = arith.truncf %38 : vector<8x128xf32> to vector<8x128xbf16>
      %c0_18 = arith.constant 0 : index
      %c0_19 = arith.constant 0 : index
      %40 = vector.load %arg18[%c0_18, %c0_19] : memref<8x128xf32, #tpu.memory_space<vmem>>, vector<8x128xf32>
      %c0_20 = arith.constant 0 : index
      %c0_21 = arith.constant 0 : index
      %41 = vector.load %arg5[%c0_20, %c0_21] : memref<128x128xi8, #tpu.memory_space<vmem>>, vector<128x128xi8>
      %42 = arith.sitofp %41 : vector<128x128xi8> to vector<128x128xf32>
      %43 = arith.truncf %42 : vector<128x128xf32> to vector<128x128xbf16>
      %cst = arith.constant dense<0.000000e+00> : vector<8x128xf32>
      %44 = tpu.matmul %39, %43, %cst {dimension_numbers = #tpu.dot_dimension_numbers<[1], [0], [0], [1], [0, 0, 1, 1], [], []>} : vector<8x128xbf16>, vector<128x128xbf16>, vector<8x128xf32> -> vector<8x128xf32>
      %45 = arith.addf %40, %44 : vector<8x128xf32>
      %c0_22 = arith.constant 0 : index
      %c0_23 = arith.constant 0 : index
      %46 = vector.load %arg18[%c0_22, %c0_23] : memref<8x128xf32, #tpu.memory_space<vmem>>, vector<8x128xf32>
      tpu.vector_store %arg18[%c0_22, %c0_23], %45 {strides = array<i32>} : memref<8x128xf32, #tpu.memory_space<vmem>>, vector<8x128xf32>,
    } else {
    }
    %c0_i32_4 = arith.constant 0 : i32
    %10 = arith.cmpi eq, %arg0, %c0_i32_4 : i32
    %c1_i32 = arith.constant 1 : i32
    %11 = arith.cmpi slt, %arg1, %c1_i32 : i32
    %12 = arith.andi %10, %11 : i1
    %13 = arith.extui %12 : i1 to i32
    %c0_i32_5 = arith.constant 0 : i32
    %14 = arith.cmpi ne, %13, %c0_i32_5 : i32
    scf.if %14 {
      %c128_i32 = arith.constant 128 : i32
      %35 = arith.muli %arg1, %c128_i32 : i32
      %36 = tpu.assume_multiple %35, 128 : i32
      %c0 = arith.constant 0 : index
      %37 = arith.index_cast %36 : i32 to index
      %38 = vector.load %arg4[%c0, %37] : memref<8x128xf32, #tpu.memory_space<vmem>>, vector<8x128xf32>
      %39 = arith.truncf %38 : vector<8x128xf32> to vector<8x128xbf16>
      %c0_18 = arith.constant 0 : index
      %c0_19 = arith.constant 0 : index
      %40 = vector.load %arg19[%c0_18, %c0_19] : memref<8x128xf32, #tpu.memory_space<vmem>>, vector<8x128xf32>
      %c0_20 = arith.constant 0 : index
      %c0_21 = arith.constant 0 : index
      %41 = vector.load %arg11[%c0_20, %c0_21] : memref<128x128xi8, #tpu.memory_space<vmem>>, vector<128x128xi8>
      %42 = arith.sitofp %41 : vector<128x128xi8> to vector<128x128xf32>
      %43 = arith.truncf %42 : vector<128x128xf32> to vector<128x128xbf16>
      %cst = arith.constant dense<0.000000e+00> : vector<8x128xf32>
      %44 = tpu.matmul %39, %43, %cst {dimension_numbers = #tpu.dot_dimension_numbers<[1], [0], [0], [1], [0, 0, 1, 1], [], []>} : vector<8x128xbf16>, vector<128x128xbf16>, vector<8x128xf32> -> vector<8x128xf32>
      %45 = arith.addf %40, %44 : vector<8x128xf32>
      %c0_22 = arith.constant 0 : index
      %c0_23 = arith.constant 0 : index
      %46 = vector.load %arg19[%c0_22, %c0_23] : memref<8x128xf32, #tpu.memory_space<vmem>>, vector<8x128xf32>
      tpu.vector_store %arg19[%c0_22, %c0_23], %45 {strides = array<i32>} : memref<8x128xf32, #tpu.memory_space<vmem>>, vector<8x128xf32>,
    } else {
    }
    %c1_i32_6 = arith.constant 1 : i32
    %15 = arith.cmpi eq, %arg0, %c1_i32_6 : i32
    %c0_i32_7 = arith.constant 0 : i32
    %16 = arith.cmpi eq, %arg1, %c0_i32_7 : i32
    %17 = arith.andi %15, %16 : i1
    %18 = arith.extui %17 : i1 to i32
    %c0_i32_8 = arith.constant 0 : i32
    %19 = arith.cmpi ne, %18, %c0_i32_8 : i32
    scf.if %19 {
      %c0 = arith.constant 0 : index
      %c0_18 = arith.constant 0 : index
      %35 = vector.load %arg18[%c0, %c0_18] : memref<8x128xf32, #tpu.memory_space<vmem>>, vector<8x128xf32>
      %c0_19 = arith.constant 0 : index
      %c0_20 = arith.constant 0 : index
      %36 = vector.load %arg6[%c0_19, %c0_20] : memref<1x128xf32, #tpu.memory_space<vmem>>, vector<1x128xf32>
      %37 = vector.broadcast %36 : vector<1x128xf32> to vector<8x128xf32>
      %38 = arith.mulf %35, %37 : vector<8x128xf32>
      %c0_21 = arith.constant 0 : index
      %c0_22 = arith.constant 0 : index
      %39 = vector.load %arg7[%c0_21, %c0_22] : memref<1x128xf32, #tpu.memory_space<vmem>>, vector<1x128xf32>
      %40 = vector.broadcast %39 : vector<1x128xf32> to vector<8x128xf32>
      %41 = arith.addf %38, %40 : vector<8x128xf32>
      %cst = arith.constant 0.000000e+00 : f32
      %42 = vector.broadcast %cst : f32 to vector<8x128xf32>
      %43 = arith.maximumf %41, %42 : vector<8x128xf32>
      %44 = arith.truncf %43 : vector<8x128xf32> to vector<8x128xbf16>
      %c0_23 = arith.constant 0 : index
      %c0_24 = arith.constant 0 : index
      %45 = vector.load %arg20[%c0_23, %c0_24] : memref<8x128xbf16, #tpu.memory_space<vmem>>, vector<8x128xbf16>
      tpu.vector_store %arg20[%c0_23, %c0_24], %44 {strides = array<i32>} : memref<8x128xbf16, #tpu.memory_space<vmem>>, vector<8x128xbf16>,
      %c0_25 = arith.constant 0 : index
      %c0_26 = arith.constant 0 : index
      %46 = vector.load %arg19[%c0_25, %c0_26] : memref<8x128xf32, #tpu.memory_space<vmem>>, vector<8x128xf32>
      %c0_27 = arith.constant 0 : index
      %c0_28 = arith.constant 0 : index
      %47 = vector.load %arg12[%c0_27, %c0_28] : memref<1x128xf32, #tpu.memory_space<vmem>>, vector<1x128xf32>
      %48 = vector.broadcast %47 : vector<1x128xf32> to vector<8x128xf32>
      %49 = arith.mulf %46, %48 : vector<8x128xf32>
      %c0_29 = arith.constant 0 : index
      %c0_30 = arith.constant 0 : index
      %50 = vector.load %arg13[%c0_29, %c0_30] : memref<1x128xf32, #tpu.memory_space<vmem>>, vector<1x128xf32>
      %51 = vector.broadcast %50 : vector<1x128xf32> to vector<8x128xf32>
      %52 = arith.addf %49, %51 : vector<8x128xf32>
      %cst_31 = arith.constant 0.000000e+00 : f32
      %53 = vector.broadcast %cst_31 : f32 to vector<8x128xf32>
      %54 = arith.maximumf %52, %53 : vector<8x128xf32>
      %55 = arith.truncf %54 : vector<8x128xf32> to vector<8x128xbf16>
      %c0_32 = arith.constant 0 : index
      %c0_33 = arith.constant 0 : index
      %56 = vector.load %arg21[%c0_32, %c0_33] : memref<8x128xbf16, #tpu.memory_space<vmem>>, vector<8x128xbf16>
      tpu.vector_store %arg21[%c0_32, %c0_33], %55 {strides = array<i32>} : memref<8x128xbf16, #tpu.memory_space<vmem>>, vector<8x128xbf16>,
      %cst_34 = arith.constant 0.000000e+00 : f32
      %57 = vector.broadcast %cst_34 : f32 to vector<8x128xf32>
      %c0_35 = arith.constant 0 : index
      %c0_36 = arith.constant 0 : index
      %58 = vector.load %arg18[%c0_35, %c0_36] : memref<8x128xf32, #tpu.memory_space<vmem>>, vector<8x128xf32>
      tpu.vector_store %arg18[%c0_35, %c0_36], %57 {strides = array<i32>} : memref<8x128xf32, #tpu.memory_space<vmem>>, vector<8x128xf32>,
      %cst_37 = arith.constant 0.000000e+00 : f32
      %59 = vector.broadcast %cst_37 : f32 to vector<8x128xf32>
      %c0_38 = arith.constant 0 : index
      %c0_39 = arith.constant 0 : index
      %60 = vector.load %arg19[%c0_38, %c0_39] : memref<8x128xf32, #tpu.memory_space<vmem>>, vector<8x128xf32>
      tpu.vector_store %arg19[%c0_38, %c0_39], %59 {strides = array<i32>} : memref<8x128xf32, #tpu.memory_space<vmem>>, vector<8x128xf32>,
    } else {
    }
    %c1_i32_9 = arith.constant 1 : i32
    %20 = arith.cmpi eq, %arg0, %c1_i32_9 : i32
    %c1_i32_10 = arith.constant 1 : i32
    %21 = arith.cmpi slt, %arg1, %c1_i32_10 : i32
    %22 = arith.andi %20, %21 : i1
    %23 = arith.extui %22 : i1 to i32
    %c0_i32_11 = arith.constant 0 : i32
    %24 = arith.cmpi ne, %23, %c0_i32_11 : i32
    scf.if %24 {
      %c128_i32 = arith.constant 128 : i32
      %35 = arith.muli %arg1, %c128_i32 : i32
      %36 = tpu.assume_multiple %35, 128 : i32
      %c0 = arith.constant 0 : index
      %c0_18 = arith.constant 0 : index
      %37 = vector.load %arg18[%c0, %c0_18] : memref<8x128xf32, #tpu.memory_space<vmem>>, vector<8x128xf32>
      %c0_19 = arith.constant 0 : index
      %38 = arith.index_cast %36 : i32 to index
      %39 = vector.load %arg20[%c0_19, %38] : memref<8x128xbf16, #tpu.memory_space<vmem>>, vector<8x128xbf16>
      %c0_20 = arith.constant 0 : index
      %c0_21 = arith.constant 0 : index
      %40 = vector.load %arg8[%c0_20, %c0_21] : memref<128x128xi8, #tpu.memory_space<vmem>>, vector<128x128xi8>
      %41 = arith.sitofp %40 : vector<128x128xi8> to vector<128x128xf32>
      %42 = arith.truncf %41 : vector<128x128xf32> to vector<128x128xbf16>
      %cst = arith.constant dense<0.000000e+00> : vector<8x128xf32>
      %43 = tpu.matmul %39, %42, %cst {dimension_numbers = #tpu.dot_dimension_numbers<[1], [0], [0], [1], [0, 0, 1, 1], [], []>} : vector<8x128xbf16>, vector<128x128xbf16>, vector<8x128xf32> -> vector<8x128xf32>
      %44 = arith.addf %37, %43 : vector<8x128xf32>
      %c0_22 = arith.constant 0 : index
      %c0_23 = arith.constant 0 : index
      %45 = vector.load %arg18[%c0_22, %c0_23] : memref<8x128xf32, #tpu.memory_space<vmem>>, vector<8x128xf32>
      tpu.vector_store %arg18[%c0_22, %c0_23], %44 {strides = array<i32>} : memref<8x128xf32, #tpu.memory_space<vmem>>, vector<8x128xf32>,
    } else {
    }
    %c1_i32_12 = arith.constant 1 : i32
    %25 = arith.cmpi eq, %arg0, %c1_i32_12 : i32
    %c1_i32_13 = arith.constant 1 : i32
    %26 = arith.cmpi slt, %arg1, %c1_i32_13 : i32
    %27 = arith.andi %25, %26 : i1
    %28 = arith.extui %27 : i1 to i32
    %c0_i32_14 = arith.constant 0 : i32
    %29 = arith.cmpi ne, %28, %c0_i32_14 : i32
    scf.if %29 {
      %c128_i32 = arith.constant 128 : i32
      %35 = arith.muli %arg1, %c128_i32 : i32
      %36 = tpu.assume_multiple %35, 128 : i32
      %c0 = arith.constant 0 : index
      %c0_18 = arith.constant 0 : index
      %37 = vector.load %arg19[%c0, %c0_18] : memref<8x128xf32, #tpu.memory_space<vmem>>, vector<8x128xf32>
      %c0_19 = arith.constant 0 : index
      %38 = arith.index_cast %36 : i32 to index
      %39 = vector.load %arg21[%c0_19, %38] : memref<8x128xbf16, #tpu.memory_space<vmem>>, vector<8x128xbf16>
      %c0_20 = arith.constant 0 : index
      %c0_21 = arith.constant 0 : index
      %40 = vector.load %arg14[%c0_20, %c0_21] : memref<128x128xi8, #tpu.memory_space<vmem>>, vector<128x128xi8>
      %41 = arith.sitofp %40 : vector<128x128xi8> to vector<128x128xf32>
      %42 = arith.truncf %41 : vector<128x128xf32> to vector<128x128xbf16>
      %cst = arith.constant dense<0.000000e+00> : vector<8x128xf32>
      %43 = tpu.matmul %39, %42, %cst {dimension_numbers = #tpu.dot_dimension_numbers<[1], [0], [0], [1], [0, 0, 1, 1], [], []>} : vector<8x128xbf16>, vector<128x128xbf16>, vector<8x128xf32> -> vector<8x128xf32>
      %44 = arith.addf %37, %43 : vector<8x128xf32>
      %c0_22 = arith.constant 0 : index
      %c0_23 = arith.constant 0 : index
      %45 = vector.load %arg19[%c0_22, %c0_23] : memref<8x128xf32, #tpu.memory_space<vmem>>, vector<8x128xf32>
      tpu.vector_store %arg19[%c0_22, %c0_23], %44 {strides = array<i32>} : memref<8x128xf32, #tpu.memory_space<vmem>>, vector<8x128xf32>,
    } else {
    }
    %c1_i32_15 = arith.constant 1 : i32
    %30 = arith.cmpi eq, %arg0, %c1_i32_15 : i32
    %c1_i32_16 = arith.constant 1 : i32
    %31 = arith.cmpi eq, %arg1, %c1_i32_16 : i32
    %32 = arith.andi %30, %31 : i1
    %33 = arith.extui %32 : i1 to i32
    %c0_i32_17 = arith.constant 0 : i32
    %34 = arith.cmpi ne, %33, %c0_i32_17 : i32
    scf.if %34 {
      %c0 = arith.constant 0 : index
      %c0_18 = arith.constant 0 : index
      %35 = vector.load %arg18[%c0, %c0_18] : memref<8x128xf32, #tpu.memory_space<vmem>>, vector<8x128xf32>
      %c0_19 = arith.constant 0 : index
      %c0_20 = arith.constant 0 : index
      %36 = vector.load %arg9[%c0_19, %c0_20] : memref<1x128xf32, #tpu.memory_space<vmem>>, vector<1x128xf32>
      %37 = vector.broadcast %36 : vector<1x128xf32> to vector<8x128xf32>
      %38 = arith.mulf %35, %37 : vector<8x128xf32>
      %c0_21 = arith.constant 0 : index
      %c0_22 = arith.constant 0 : index
      %39 = vector.load %arg10[%c0_21, %c0_22] : memref<1x128xf32, #tpu.memory_space<vmem>>, vector<1x128xf32>
      %40 = vector.broadcast %39 : vector<1x128xf32> to vector<8x128xf32>
      %41 = arith.addf %38, %40 : vector<8x128xf32>
      %c0_23 = arith.constant 0 : index
      %c0_24 = arith.constant 0 : index
      %42 = vector.load %arg19[%c0_23, %c0_24] : memref<8x128xf32, #tpu.memory_space<vmem>>, vector<8x128xf32>
      %c0_25 = arith.constant 0 : index
      %c0_26 = arith.constant 0 : index
      %43 = vector.load %arg15[%c0_25, %c0_26] : memref<1x128xf32, #tpu.memory_space<vmem>>, vector<1x128xf32>
      %44 = vector.broadcast %43 : vector<1x128xf32> to vector<8x128xf32>
      %45 = arith.mulf %42, %44 : vector<8x128xf32>
      %c0_27 = arith.constant 0 : index
      %c0_28 = arith.constant 0 : index
      %46 = vector.load %arg16[%c0_27, %c0_28] : memref<1x128xf32, #tpu.memory_space<vmem>>, vector<1x128xf32>
      %47 = vector.broadcast %46 : vector<1x128xf32> to vector<8x128xf32>
      %48 = arith.addf %45, %47 : vector<8x128xf32>
      %49 = arith.mulf %41, %41 : vector<8x128xf32>
      %cst = arith.constant dense<0.000000e+00> : vector<8xf32>
      %50 = vector.multi_reduction <add>, %49, %cst [1] : vector<8x128xf32> to vector<8xf32>
      %51 = vector.shape_cast %50 : vector<8xf32> to vector<8x1xf32>
      %cst_29 = arith.constant 1.000000e-24 : f32
      %52 = vector.broadcast %cst_29 : f32 to vector<8x1xf32>
      %53 = arith.maximumf %51, %52 : vector<8x1xf32>
      %54 = math.rsqrt %53 : vector<8x1xf32>
      %55 = arith.mulf %48, %48 : vector<8x128xf32>
      %cst_30 = arith.constant dense<0.000000e+00> : vector<8xf32>
      %56 = vector.multi_reduction <add>, %55, %cst_30 [1] : vector<8x128xf32> to vector<8xf32>
      %57 = vector.shape_cast %56 : vector<8xf32> to vector<8x1xf32>
      %cst_31 = arith.constant 1.000000e-24 : f32
      %58 = vector.broadcast %cst_31 : f32 to vector<8x1xf32>
      %59 = arith.maximumf %57, %58 : vector<8x1xf32>
      %60 = math.rsqrt %59 : vector<8x1xf32>
      %c0_32 = arith.constant 0 : index
      %c0_33 = arith.constant 0 : index
      %61 = memref.load %arg2[%c0_32, %c0_33] : memref<1x1xf32, #tpu.memory_space<smem>>
      %62 = vector.broadcast %61 : f32 to vector<8x1xf32>
      %63 = arith.mulf %54, %62 : vector<8x1xf32>
      %64 = vector.broadcast %63 : vector<8x1xf32> to vector<8x128xf32>
      %65 = arith.mulf %41, %64 : vector<8x128xf32>
      %66 = vector.broadcast %60 : vector<8x1xf32> to vector<8x128xf32>
      %67 = arith.mulf %48, %66 : vector<8x128xf32>
      %cst_34 = arith.constant dense<0.000000e+00> : vector<8x8xf32>
      %68 = tpu.matmul %65, %67, %cst_34 {dimension_numbers = #tpu.dot_dimension_numbers<[1], [1], [0], [0], [0, 0, 1, 0], [], []>} : vector<8x128xf32>, vector<8x128xf32>, vector<8x8xf32> -> vector<8x8xf32>
      %c0_35 = arith.constant 0 : index
      %c0_36 = arith.constant 0 : index
      %69 = vector.load %arg17[%c0_35, %c0_36] : memref<8x8xf32, #tpu.memory_space<vmem>>, vector<8x8xf32>
      tpu.vector_store %arg17[%c0_35, %c0_36], %68 {strides = array<i32>} : memref<8x8xf32, #tpu.memory_space<vmem>>, vector<8x8xf32>,
    } else {
    }
    return
  }
  func.func @transform_0(%arg0: i32, %arg1: i32) -> (i32, i32) {
    %c0_i32 = arith.constant 0 : i32
    %c0_i32_0 = arith.constant 0 : i32
    %c0_i32_1 = arith.constant 0 : i32
    return %c0_i32, %c0_i32_0 : i32, i32
  }
  func.func @transform_1(%arg0: i32, %arg1: i32) -> (i32, i32) {
    %c0_i32 = arith.constant 0 : i32
    %c0_i32_0 = arith.constant 0 : i32
    %c0_i32_1 = arith.constant 0 : i32
    return %c0_i32, %c0_i32_0 : i32, i32
  }
  func.func @transform_2(%arg0: i32, %arg1: i32) -> (i32, i32) {
    %c0_i32 = arith.constant 0 : i32
    %c0_i32_0 = arith.constant 0 : i32
    %c0_i32_1 = arith.constant 0 : i32
    return %c0_i32, %c0_i32_0 : i32, i32
  }
  func.func @transform_3(%arg0: i32, %arg1: i32) -> (i32, i32) {
    %c2_i32 = arith.constant 2 : i32
    %0 = arith.muli %arg0, %c2_i32 : i32
    %1 = arith.addi %arg1, %0 : i32
    %c1_i32 = arith.constant 1 : i32
    %2 = arith.minsi %1, %c1_i32 : i32
    %c0_i32 = arith.constant 0 : i32
    %c0_i32_0 = arith.constant 0 : i32
    return %2, %c0_i32 : i32, i32
  }
  func.func @transform_4(%arg0: i32, %arg1: i32) -> (i32, i32) {
    %c0_i32 = arith.constant 0 : i32
    %c0_i32_0 = arith.constant 0 : i32
    %c0_i32_1 = arith.constant 0 : i32
    return %c0_i32, %c0_i32_0 : i32, i32
  }
  func.func @transform_5(%arg0: i32, %arg1: i32) -> (i32, i32) {
    %c0_i32 = arith.constant 0 : i32
    %c0_i32_0 = arith.constant 0 : i32
    %c0_i32_1 = arith.constant 0 : i32
    return %c0_i32, %c0_i32_0 : i32, i32
  }
  func.func @transform_6(%arg0: i32, %arg1: i32) -> (i32, i32) {
    %0 = arith.muli %arg1, %arg0 : i32
    %c0_i32 = arith.constant 0 : i32
    %1 = arith.minsi %0, %c0_i32 : i32
    %c0_i32_0 = arith.constant 0 : i32
    %c0_i32_1 = arith.constant 0 : i32
    return %1, %c0_i32_0 : i32, i32
  }
  func.func @transform_7(%arg0: i32, %arg1: i32) -> (i32, i32) {
    %c0_i32 = arith.constant 0 : i32
    %c0_i32_0 = arith.constant 0 : i32
    %c0_i32_1 = arith.constant 0 : i32
    return %c0_i32, %c0_i32_0 : i32, i32
  }
  func.func @transform_8(%arg0: i32, %arg1: i32) -> (i32, i32) {
    %c0_i32 = arith.constant 0 : i32
    %c0_i32_0 = arith.constant 0 : i32
    %c0_i32_1 = arith.constant 0 : i32
    return %c0_i32, %c0_i32_0 : i32, i32
  }
  func.func @transform_9(%arg0: i32, %arg1: i32) -> (i32, i32) {
    %c2_i32 = arith.constant 2 : i32
    %0 = arith.muli %arg0, %c2_i32 : i32
    %1 = arith.addi %arg1, %0 : i32
    %c0_i32 = arith.constant 0 : i32
    %2 = arith.minsi %1, %c0_i32 : i32
    %c0_i32_0 = arith.constant 0 : i32
    %c0_i32_1 = arith.constant 0 : i32
    return %2, %c0_i32_0 : i32, i32
  }
  func.func @transform_10(%arg0: i32, %arg1: i32) -> (i32, i32) {
    %c0_i32 = arith.constant 0 : i32
    %c0_i32_0 = arith.constant 0 : i32
    %c0_i32_1 = arith.constant 0 : i32
    return %c0_i32, %c0_i32_0 : i32, i32
  }
  func.func @transform_11(%arg0: i32, %arg1: i32) -> (i32, i32) {
    %c0_i32 = arith.constant 0 : i32
    %c0_i32_0 = arith.constant 0 : i32
    %c0_i32_1 = arith.constant 0 : i32
    return %c0_i32, %c0_i32_0 : i32, i32
  }
  func.func @transform_12(%arg0: i32, %arg1: i32) -> (i32, i32) {
    %0 = arith.muli %arg1, %arg0 : i32
    %c0_i32 = arith.constant 0 : i32
    %1 = arith.minsi %0, %c0_i32 : i32
    %c0_i32_0 = arith.constant 0 : i32
    %c0_i32_1 = arith.constant 0 : i32
    return %1, %c0_i32_0 : i32, i32
  }
  func.func @transform_13(%arg0: i32, %arg1: i32) -> (i32, i32) {
    %c0_i32 = arith.constant 0 : i32
    %c0_i32_0 = arith.constant 0 : i32
    %c0_i32_1 = arith.constant 0 : i32
    return %c0_i32, %c0_i32_0 : i32, i32
  }
  func.func @transform_14(%arg0: i32, %arg1: i32) -> (i32, i32) {
    %c0_i32 = arith.constant 0 : i32
    %c0_i32_0 = arith.constant 0 : i32
    %c0_i32_1 = arith.constant 0 : i32
    return %c0_i32, %c0_i32_0 : i32, i32
  }
  func.func @transform_15(%arg0: i32, %arg1: i32) -> (i32, i32) {
    %c0_i32 = arith.constant 0 : i32
    %c0_i32_0 = arith.constant 0 : i32
    %c0_i32_1 = arith.constant 0 : i32
    return %c0_i32, %c0_i32_0 : i32, i32
  }
}

</mosaic_0001>

<llo_original>
// kernel: tpu_custom_call.1
$region0: #{tpu_custom_call.1}
  #allocation0 [shape = 'u32[]', space=smem, size = 0x4, offset = 0x4, fixed_abs, tag = 'smem constant byte address 0x4 - core index']
  #allocation1 [shape = 'u32[72,128]{1,0:T(1,128)}', space=vmem, size = 0x9000, scoped, tag = 'internal scratch']
  #allocation2 [shape = 'f32[8,128]{1,0:T(8,128)}', space=vmem, size = 0x1000, scoped, tag = 'scratch operand']
  #allocation3 [shape = 'f32[8,128]{1,0:T(8,128)}', space=vmem, size = 0x1000, scoped, tag = 'scratch operand']
  #allocation4 [shape = 'bf16[8,128]{1,0:T(8,128)(2,1)}', space=vmem, size = 0x800, scoped, tag = 'scratch operand']
  #allocation5 [shape = 'bf16[8,128]{1,0:T(8,128)(2,1)}', space=vmem, size = 0x800, scoped, tag = 'scratch operand']
  #allocation6 [shape = 'f32[1,1]{1,0:T(1,128)S(6)}', space=smem, size = 0x200, scoped, tag = 'scoped memory for tpu_custom_call.1']
  %s0 = inlined_call_operand.<no memory space> [shape: f32[1,1], index: 0, kind: input, shape index: {}]
  %s1 = inlined_call_operand.hbm [shape: f32[8,256], index: 1, kind: input, shape index: {}]
  %s2 = inlined_call_operand.hbm [shape: f32[8,128], index: 2, kind: input, shape index: {}]
  %s3 = inlined_call_operand.hbm [shape: s8[256,128], index: 3, kind: input, shape index: {}]
  %s4 = inlined_call_operand.vmem [shape: f32[1,128], index: 4, kind: input, shape index: {}]
  %s5 = inlined_call_operand.vmem [shape: f32[1,128], index: 5, kind: input, shape index: {}]
  %s6 = inlined_call_operand.hbm [shape: s8[128,128], index: 6, kind: input, shape index: {}]
  %s7 = inlined_call_operand.vmem [shape: f32[1,128], index: 7, kind: input, shape index: {}]
  %s8 = inlined_call_operand.vmem [shape: f32[1,128], index: 8, kind: input, shape index: {}]
  %s9 = inlined_call_operand.hbm [shape: s8[128,128], index: 9, kind: input, shape index: {}]
  %s10 = inlined_call_operand.vmem [shape: f32[1,128], index: 10, kind: input, shape index: {}]
  %s11 = inlined_call_operand.vmem [shape: f32[1,128], index: 11, kind: input, shape index: {}]
  %s12 = inlined_call_operand.hbm [shape: s8[128,128], index: 12, kind: input, shape index: {}]
  %s13 = inlined_call_operand.vmem [shape: f32[1,128], index: 13, kind: input, shape index: {}]
  %s14 = inlined_call_operand.vmem [shape: f32[1,128], index: 14, kind: input, shape index: {}]
  %s15 = inlined_call_operand.hbm [shape: f32[8,8], index: 15, kind: output, shape index: {}]
  %s16 = sld [smem:[#allocation0]]
  $region141: #{tpu_custom_call.1} parent=0
    _
  %s18 = ssub.s32 1, %s16
  %s19 = scalar_select 0, %s18, %s16
  %20 = sst [smem:[#allocation6]] %s0
  $region1: #{tpu_custom_call.1} parent=0
    #allocation7 [shape = 'u8[8192]{0}', space=vmem, size = 0x2000, scoped, tag = 'input window, operand 1, single buffered']
    #allocation8 [shape = 's32[2]{0}', space=sflag, size = 0x8, scoped, tag = 'scoped memory for tpu_custom_call.1']
    #allocation9 [shape = 's32[2]{0}', space=sflag, size = 0x8, scoped, tag = 'scoped memory for tpu_custom_call.1']
    #allocation10 [shape = 'u8[4096]{0}', space=vmem, size = 0x1000, scoped, tag = 'input window, operand 2, single buffered']
    #allocation11 [shape = 's32[1]{0}', space=sflag, size = 0x4, scoped, tag = 'scoped memory for tpu_custom_call.1']
    #allocation12 [shape = 'u8[32768]{0}', space=vmem, size = 0x8000, scoped, tag = 'input window, operand 3']
    #allocation13 [shape = 'u8[32768]{0}', space=vmem, size = 0x8000, scoped, tag = 'input window, operand 6']
    #allocation14 [shape = 'u8[32768]{0}', space=vmem, size = 0x8000, scoped, tag = 'input window, operand 9']
    #allocation15 [shape = 'u8[32768]{0}', space=vmem, size = 0x8000, scoped, tag = 'input window, operand 12']
    #allocation16 [shape = 'u8[4096]{0}', space=vmem, size = 0x1000, scoped, tag = 'output window, operand 0, single buffered']
    %21 = vsyncpa [#allocation8], 0
    %22 = vsyncpa [#allocation11], 0
    %23 = vsyncpa [#allocation9], 0
    loop: start=0, step=1, limit=6
    $region2: #{tpu_custom_call.1} parent=1 // loop_pre_header
      _
    $region3: #{tpu_custom_call.1} parent=1 // loop_header
      %s25 = sphi 0, %s29
      %p26 = scmp.ge.s32.totalorder %s25, 6
      %s32 = sphi 0, %s44
      %s33 = sphi 0, %s40
      %s34 = sphi 0, %s32
      %s35 = sphi 0, %s33
      %s36 = sphi 0, %s34
      %s37 = sphi 0, %s35
      %s45 = sphi 0, %s45
      %s47 = sphi 0, %s45
      %s48 = sphi 0, %s47
      %s62 = sphi 0, %s48
      %s66 = sphi 0, %s66
      %s68 = sphi 0, %s66
      %s69 = sphi 0, %s68
      %s83 = sphi 0, %s69
      %s87 = sphi 0, %s87
      %s89 = sphi 0, %s87
      %s90 = sphi 0, %s89
      %s104 = sphi 0, %s90
      %s118 = sphi 0, %s120
      %s121 = sphi 0, %s118
      %s122 = sphi 0, %s121
      %s138 = sphi 0, %s122
      %s142 = sphi 0, %s142
      %s144 = sphi 0, %s142
      %s145 = sphi 0, %s144
      %s159 = sphi 0, %s145
      %s163 = sphi 0, %s163
      %s165 = sphi 0, %s163
      %s166 = sphi 0, %s165
      %s180 = sphi 0, %s166
      %s192 = sphi 0, %s194
      %s195 = sphi 0, %s192
      %s196 = sphi 0, %s195
      %s212 = sphi 0, %s196
      %s216 = sphi 0, %s216
      %s218 = sphi 0, %s216
      %s219 = sphi 0, %s218
      %s233 = sphi 0, %s219
      %s237 = sphi 0, %s237
      %s239 = sphi 0, %s237
      %s240 = sphi 0, %s239
      %s254 = sphi 0, %s240
      %s268 = sphi 0, %s270
      %s271 = sphi 0, %s268
      %s272 = sphi 0, %s271
      %s288 = sphi 0, %s272
      %s292 = sphi 0, %s292
      %s294 = sphi 0, %s292
      %s295 = sphi 0, %s294
      %s309 = sphi 0, %s295
      %s313 = sphi 0, %s313
      %s315 = sphi 0, %s313
      %s316 = sphi 0, %s315
      %s330 = sphi 0, %s316
      %s342 = sphi 0, %s344
      %s345 = sphi 0, %s342
      %s346 = sphi 0, %s345
      %s362 = sphi 0, %s346
      %s366 = sphi 0, %s366
      %s368 = sphi 0, %s366
      %s369 = sphi 0, %s368
      %s383 = sphi 0, %s369
      %s387 = sphi 0, %s387
      %s389 = sphi 0, %s387
      %s390 = sphi 0, %s389
      %s404 = sphi 0, %s390
      %s408 = sphi 0, %s408
      %s410 = sphi 0, %s408
      %s411 = sphi 0, %s410
      %s425 = sphi 0, %s411
    $region4: #{tpu_custom_call.1} parent=1 // loop_header_branch
      %28 = sbr.rel (%p26) target = $region8
    $region5: #{tpu_custom_call.1} parent=1 // loop_body
      %s30 = ssub.s32 %s25, 1
      %s31 = ssub.s32 %s25, 2
      %s38 = sadd.s32 1, %s33
      %p39 = scmp.ge.s32.totalorder %s38, 2
      %s40 = scalar_select %p39, 0, %s38
      %s41 = sadd.s32 1, %s32
      %s42 = scalar_select %p39, %s41, %s32
      %p43 = scmp.ge.s32.totalorder %s42, 2
      %s44 = scalar_select %p43, 0, %s42
      %s46 = sadd.s32 %s45, 1
      %p49 = scmp.eq.s32.totalorder %s25, 3
      %p50 = scmp.ne.s32.totalorder %s45, %s47
      %p51 = scmp.eq.s32.totalorder %s25, 0
      %p52 = por %p50, %p51
      %p53 = scmp.ne.s32.totalorder %s45, %s47
      %p54 = scmp.eq.s32.totalorder %s30, 3
      %p55 = por %p53, %p54
      %p56 = scmp.ne.s32.totalorder %s47, %s48
      %p57 = scmp.eq.s32.totalorder %s30, 0
      %p58 = por %p56, %p57
      %p59 = scmp.ne.s32.totalorder %s47, %s48
      %p60 = scmp.eq.s32.totalorder %s31, 3
      %p61 = por %p59, %p60
      %p63 = scmp.ne.s32.totalorder %s48, %s62
      %p64 = scmp.eq.s32.totalorder %s31, 0
      %p65 = por %p63, %p64
      %s67 = sadd.s32 %s66, 1
      %p70 = scmp.eq.s32.totalorder %s25, 3
      %p71 = scmp.ne.s32.totalorder %s66, %s68
      %p72 = scmp.eq.s32.totalorder %s25, 0
      %p73 = por %p71, %p72
      %p74 = scmp.ne.s32.totalorder %s66, %s68
      %p75 = scmp.eq.s32.totalorder %s30, 3
      %p76 = por %p74, %p75
      %p77 = scmp.ne.s32.totalorder %s68, %s69
      %p78 = scmp.eq.s32.totalorder %s30, 0
      %p79 = por %p77, %p78
      %p80 = scmp.ne.s32.totalorder %s68, %s69
      %p81 = scmp.eq.s32.totalorder %s31, 3
      %p82 = por %p80, %p81
      %p84 = scmp.ne.s32.totalorder %s69, %s83
      %p85 = scmp.eq.s32.totalorder %s31, 0
      %p86 = por %p84, %p85
      %s88 = sadd.s32 %s87, 1
      %p91 = scmp.eq.s32.totalorder %s25, 3
      %p92 = scmp.ne.s32.totalorder %s87, %s89
      %p93 = scmp.eq.s32.totalorder %s25, 0
      %p94 = por %p92, %p93
      %p95 = scmp.ne.s32.totalorder %s87, %s89
      %p96 = scmp.eq.s32.totalorder %s30, 3
      %p97 = por %p95, %p96
      %p98 = scmp.ne.s32.totalorder %s89, %s90
      %p99 = scmp.eq.s32.totalorder %s30, 0
      %p100 = por %p98, %p99
      %p101 = scmp.ne.s32.totalorder %s89, %s90
      %p102 = scmp.eq.s32.totalorder %s31, 3
      %p103 = por %p101, %p102
      %p105 = scmp.ne.s32.totalorder %s90, %s104
      %p106 = scmp.eq.s32.totalorder %s31, 0
      %p107 = por %p105, %p106
      %s108 = smul.u32 %s32, 2
      %s109 = sadd.s32 %s33, %s108
      %p110 = scmp.lt.s32.totalorder %s109, 1
      %s111 = scalar_select %p110, %s109, 1
      %s112 = smul.u32 %s44, 2
      %s113 = sadd.s32 %s40, %s112
      %p114 = scmp.lt.s32.totalorder %s113, 1
      %s115 = scalar_select %p114, %s113, 1
      %s116 = ssub.s32 %s111, %s115
      %p117 = scmp.eq.s32.totalorder %s116, 0
      %s119 = sadd.s32 %s118, 1
      %s120 = scalar_select %p117, %s118, %s119
      %p123 = pneg %p117
      %p124 = scmp.eq.s32.totalorder %s25, 3
      %p125 = por %p123, %p124
      %p126 = scmp.ne.s32.totalorder %s118, %s121
      %p127 = scmp.eq.s32.totalorder %s25, 0
      %p128 = por %p126, %p127
      %p129 = scmp.ne.s32.totalorder %s118, %s121
      %p130 = scmp.eq.s32.totalorder %s30, 3
      %p131 = por %p129, %p130
      %p132 = scmp.ne.s32.totalorder %s121, %s122
      %p133 = scmp.eq.s32.totalorder %s30, 0
      %p134 = por %p132, %p133
      %p135 = scmp.ne.s32.totalorder %s121, %s122
      %p136 = scmp.eq.s32.totalorder %s31, 3
      %p137 = por %p135, %p136
      %p139 = scmp.ne.s32.totalorder %s122, %s138
      %p140 = scmp.eq.s32.totalorder %s31, 0
      %p141 = por %p139, %p140
      %s143 = sadd.s32 %s142, 1
      %p146 = scmp.eq.s32.totalorder %s25, 3
      %p147 = scmp.ne.s32.totalorder %s142, %s144
      %p148 = scmp.eq.s32.totalorder %s25, 0
      %p149 = por %p147, %p148
      %p150 = scmp.ne.s32.totalorder %s142, %s144
      %p151 = scmp.eq.s32.totalorder %s30, 3
      %p152 = por %p150, %p151
      %p153 = scmp.ne.s32.totalorder %s144, %s145
      %p154 = scmp.eq.s32.totalorder %s30, 0
      %p155 = por %p153, %p154
      %p156 = scmp.ne.s32.totalorder %s144, %s145
      %p157 = scmp.eq.s32.totalorder %s31, 3
      %p158 = por %p156, %p157
      %p160 = scmp.ne.s32.totalorder %s145, %s159
      %p161 = scmp.eq.s32.totalorder %s31, 0
      %p162 = por %p160, %p161
      %s164 = sadd.s32 %s163, 1
      %p167 = scmp.eq.s32.totalorder %s25, 3
      %p168 = scmp.ne.s32.totalorder %s163, %s165
      %p169 = scmp.eq.s32.totalorder %s25, 0
      %p170 = por %p168, %p169
      %p171 = scmp.ne.s32.totalorder %s163, %s165
      %p172 = scmp.eq.s32.totalorder %s30, 3
      %p173 = por %p171, %p172
      %p174 = scmp.ne.s32.totalorder %s165, %s166
      %p175 = scmp.eq.s32.totalorder %s30, 0
      %p176 = por %p174, %p175
      %p177 = scmp.ne.s32.totalorder %s165, %s166
      %p178 = scmp.eq.s32.totalorder %s31, 3
      %p179 = por %p177, %p178
      %p181 = scmp.ne.s32.totalorder %s166, %s180
      %p182 = scmp.eq.s32.totalorder %s31, 0
      %p183 = por %p181, %p182
      %s184 = smul.u32 %s33, %s32
      %p185 = scmp.lt.s32.totalorder %s184, 0
      %s186 = scalar_select %p185, %s184, 0
      %s187 = smul.u32 %s40, %s44
      %p188 = scmp.lt.s32.totalorder %s187, 0
      %s189 = scalar_select %p188, %s187, 0
      %s190 = ssub.s32 %s186, %s189
      %p191 = scmp.eq.s32.totalorder %s190, 0
      %s193 = sadd.s32 %s192, 1
      %s194 = scalar_select %p191, %s192, %s193
      %p197 = pneg %p191
      %p198 = scmp.eq.s32.totalorder %s25, 3
      %p199 = por %p197, %p198
      %p200 = scmp.ne.s32.totalorder %s192, %s195
      %p201 = scmp.eq.s32.totalorder %s25, 0
      %p202 = por %p200, %p201
      %p203 = scmp.ne.s32.totalorder %s192, %s195
      %p204 = scmp.eq.s32.totalorder %s30, 3
      %p205 = por %p203, %p204
      %p206 = scmp.ne.s32.totalorder %s195, %s196
      %p207 = scmp.eq.s32.totalorder %s30, 0
      %p208 = por %p206, %p207
      %p209 = scmp.ne.s32.totalorder %s195, %s196
      %p210 = scmp.eq.s32.totalorder %s31, 3
      %p211 = por %p209, %p210
      %p213 = scmp.ne.s32.totalorder %s196, %s212
      %p214 = scmp.eq.s32.totalorder %s31, 0
      %p215 = por %p213, %p214
      %s217 = sadd.s32 %s216, 1
      %p220 = scmp.eq.s32.totalorder %s25, 3
      %p221 = scmp.ne.s32.totalorder %s216, %s218
      %p222 = scmp.eq.s32.totalorder %s25, 0
      %p223 = por %p221, %p222
      %p224 = scmp.ne.s32.totalorder %s216, %s218
      %p225 = scmp.eq.s32.totalorder %s30, 3
      %p226 = por %p224, %p225
      %p227 = scmp.ne.s32.totalorder %s218, %s219
      %p228 = scmp.eq.s32.totalorder %s30, 0
      %p229 = por %p227, %p228
      %p230 = scmp.ne.s32.totalorder %s218, %s219
      %p231 = scmp.eq.s32.totalorder %s31, 3
      %p232 = por %p230, %p231
      %p234 = scmp.ne.s32.totalorder %s219, %s233
      %p235 = scmp.eq.s32.totalorder %s31, 0
      %p236 = por %p234, %p235
      %s238 = sadd.s32 %s237, 1
      %p241 = scmp.eq.s32.totalorder %s25, 3
      %p242 = scmp.ne.s32.totalorder %s237, %s239
      %p243 = scmp.eq.s32.totalorder %s25, 0
      %p244 = por %p242, %p243
      %p245 = scmp.ne.s32.totalorder %s237, %s239
      %p246 = scmp.eq.s32.totalorder %s30, 3
      %p247 = por %p245, %p246
      %p248 = scmp.ne.s32.totalorder %s239, %s240
      %p249 = scmp.eq.s32.totalorder %s30, 0
      %p250 = por %p248, %p249
      %p251 = scmp.ne.s32.totalorder %s239, %s240
      %p252 = scmp.eq.s32.totalorder %s31, 3
      %p253 = por %p251, %p252
      %p255 = scmp.ne.s32.totalorder %s240, %s254
      %p256 = scmp.eq.s32.totalorder %s31, 0
      %p257 = por %p255, %p256
      %s258 = smul.u32 %s32, 2
      %s259 = sadd.s32 %s33, %s258
      %p260 = scmp.lt.s32.totalorder %s259, 0
      %s261 = scalar_select %p260, %s259, 0
      %s262 = smul.u32 %s44, 2
      %s263 = sadd.s32 %s40, %s262
      %p264 = scmp.lt.s32.totalorder %s263, 0
      %s265 = scalar_select %p264, %s263, 0
      %s266 = ssub.s32 %s261, %s265
      %p267 = scmp.eq.s32.totalorder %s266, 0
      %s269 = sadd.s32 %s268, 1
      %s270 = scalar_select %p267, %s268, %s269
      %p273 = pneg %p267
      %p274 = scmp.eq.s32.totalorder %s25, 3
      %p275 = por %p273, %p274
      %p276 = scmp.ne.s32.totalorder %s268, %s271
      %p277 = scmp.eq.s32.totalorder %s25, 0
      %p278 = por %p276, %p277
      %p279 = scmp.ne.s32.totalorder %s268, %s271
      %p280 = scmp.eq.s32.totalorder %s30, 3
      %p281 = por %p279, %p280
      %p282 = scmp.ne.s32.totalorder %s271, %s272
      %p283 = scmp.eq.s32.totalorder %s30, 0
      %p284 = por %p282, %p283
      %p285 = scmp.ne.s32.totalorder %s271, %s272
      %p286 = scmp.eq.s32.totalorder %s31, 3
      %p287 = por %p285, %p286
      %p289 = scmp.ne.s32.totalorder %s272, %s288
      %p290 = scmp.eq.s32.totalorder %s31, 0
      %p291 = por %p289, %p290
      %s293 = sadd.s32 %s292, 1
      %p296 = scmp.eq.s32.totalorder %s25, 3
      %p297 = scmp.ne.s32.totalorder %s292, %s294
      %p298 = scmp.eq.s32.totalorder %s25, 0
      %p299 = por %p297, %p298
      %p300 = scmp.ne.s32.totalorder %s292, %s294
      %p301 = scmp.eq.s32.totalorder %s30, 3
      %p302 = por %p300, %p301
      %p303 = scmp.ne.s32.totalorder %s294, %s295
      %p304 = scmp.eq.s32.totalorder %s30, 0
      %p305 = por %p303, %p304
      %p306 = scmp.ne.s32.totalorder %s294, %s295
      %p307 = scmp.eq.s32.totalorder %s31, 3
      %p308 = por %p306, %p307
      %p310 = scmp.ne.s32.totalorder %s295, %s309
      %p311 = scmp.eq.s32.totalorder %s31, 0
      %p312 = por %p310, %p311
      %s314 = sadd.s32 %s313, 1
      %p317 = scmp.eq.s32.totalorder %s25, 3
      %p318 = scmp.ne.s32.totalorder %s313, %s315
      %p319 = scmp.eq.s32.totalorder %s25, 0
      %p320 = por %p318, %p319
      %p321 = scmp.ne.s32.totalorder %s313, %s315
      %p322 = scmp.eq.s32.totalorder %s30, 3
      %p323 = por %p321, %p322
      %p324 = scmp.ne.s32.totalorder %s315, %s316
      %p325 = scmp.eq.s32.totalorder %s30, 0
      %p326 = por %p324, %p325
      %p327 = scmp.ne.s32.totalorder %s315, %s316
      %p328 = scmp.eq.s32.totalorder %s31, 3
      %p329 = por %p327, %p328
      %p331 = scmp.ne.s32.totalorder %s316, %s330
      %p332 = scmp.eq.s32.totalorder %s31, 0
      %p333 = por %p331, %p332
      %s334 = smul.u32 %s33, %s32
      %p335 = scmp.lt.s32.totalorder %s334, 0
      %s336 = scalar_select %p335, %s334, 0
      %s337 = smul.u32 %s40, %s44
      %p338 = scmp.lt.s32.totalorder %s337, 0
      %s339 = scalar_select %p338, %s337, 0
      %s340 = ssub.s32 %s336, %s339
      %p341 = scmp.eq.s32.totalorder %s340, 0
      %s343 = sadd.s32 %s342, 1
      %s344 = scalar_select %p341, %s342, %s343
      %p347 = pneg %p341
      %p348 = scmp.eq.s32.totalorder %s25, 3
      %p349 = por %p347, %p348
      %p350 = scmp.ne.s32.totalorder %s342, %s345
      %p351 = scmp.eq.s32.totalorder %s25, 0
      %p352 = por %p350, %p351
      %p353 = scmp.ne.s32.totalorder %s342, %s345
      %p354 = scmp.eq.s32.totalorder %s30, 3
      %p355 = por %p353, %p354
      %p356 = scmp.ne.s32.totalorder %s345, %s346
      %p357 = scmp.eq.s32.totalorder %s30, 0
      %p358 = por %p356, %p357
      %p359 = scmp.ne.s32.totalorder %s345, %s346
      %p360 = scmp.eq.s32.totalorder %s31, 3
      %p361 = por %p359, %p360
      %p363 = scmp.ne.s32.totalorder %s346, %s362
      %p364 = scmp.eq.s32.totalorder %s31, 0
      %p365 = por %p363, %p364
      %s367 = sadd.s32 %s366, 1
      %p370 = scmp.eq.s32.totalorder %s25, 3
      %p371 = scmp.ne.s32.totalorder %s366, %s368
      %p372 = scmp.eq.s32.totalorder %s25, 0
      %p373 = por %p371, %p372
      %p374 = scmp.ne.s32.totalorder %s366, %s368
      %p375 = scmp.eq.s32.totalorder %s30, 3
      %p376 = por %p374, %p375
      %p377 = scmp.ne.s32.totalorder %s368, %s369
      %p378 = scmp.eq.s32.totalorder %s30, 0
      %p379 = por %p377, %p378
      %p380 = scmp.ne.s32.totalorder %s368, %s369
      %p381 = scmp.eq.s32.totalorder %s31, 3
      %p382 = por %p380, %p381
      %p384 = scmp.ne.s32.totalorder %s369, %s383
      %p385 = scmp.eq.s32.totalorder %s31, 0
      %p386 = por %p384, %p385
      %s388 = sadd.s32 %s387, 1
      %p391 = scmp.eq.s32.totalorder %s25, 3
      %p392 = scmp.ne.s32.totalorder %s387, %s389
      %p393 = scmp.eq.s32.totalorder %s25, 0
      %p394 = por %p392, %p393
      %p395 = scmp.ne.s32.totalorder %s387, %s389
      %p396 = scmp.eq.s32.totalorder %s30, 3
      %p397 = por %p395, %p396
      %p398 = scmp.ne.s32.totalorder %s389, %s390
      %p399 = scmp.eq.s32.totalorder %s30, 0
      %p400 = por %p398, %p399
      %p401 = scmp.ne.s32.totalorder %s389, %s390
      %p402 = scmp.eq.s32.totalorder %s31, 3
      %p403 = por %p401, %p402
      %p405 = scmp.ne.s32.totalorder %s390, %s404
      %p406 = scmp.eq.s32.totalorder %s31, 0
      %p407 = por %p405, %p406
      %s409 = sadd.s32 %s408, 1
      %p412 = scmp.eq.s32.totalorder %s25, 3
      %p413 = scmp.ne.s32.totalorder %s408, %s410
      %p414 = scmp.eq.s32.totalorder %s25, 0
      %p415 = por %p413, %p414
      %p416 = scmp.ne.s32.totalorder %s408, %s410
      %p417 = scmp.eq.s32.totalorder %s30, 3
      %p418 = por %p416, %p417
      %p419 = scmp.ne.s32.totalorder %s410, %s411
      %p420 = scmp.eq.s32.totalorder %s30, 0
      %p421 = por %p419, %p420
      %p422 = scmp.ne.s32.totalorder %s410, %s411
      %p423 = scmp.eq.s32.totalorder %s31, 3
      %p424 = por %p422, %p423
      %p426 = scmp.ne.s32.totalorder %s411, %s425
      %p427 = scmp.eq.s32.totalorder %s31, 0
      %p428 = por %p426, %p427
      %p429 = scmp.le.s32.totalorder 1, %s25
      %p430 = scmp.lt.s32.totalorder %s25, 5
      %p431 = pnand %p429, %p430
      %p432 = pneg %p431
      // Predicated region
      $region9: #{tpu_custom_call.1} parent=5 // pred_check
        _
      $region10: #{tpu_custom_call.1} parent=5 // pred_check_branch
        %434 = sbr.rel (%p431) target = $region12
      $region11: #{tpu_custom_call.1} parent=5 // pred_region
        %s435 = ssub.s32 %s25, 1
        // Predicated region
        $region13: #{tpu_custom_call.1} parent=11 // pred_check
          %p436 = pneg %p58
        $region14: #{tpu_custom_call.1} parent=11 // pred_check_branch
          %438 = sbr.rel (%p436) target = $region16
        $region15: #{tpu_custom_call.1} parent=11 // pred_region
          _
        $region16: #{tpu_custom_call.1} parent=11 // pred_fallthru
          _
        // Predicated region
        $region17: #{tpu_custom_call.1} parent=11 // pred_check
          %p439 = pneg %p79
        $region18: #{tpu_custom_call.1} parent=11 // pred_check_branch
          %441 = sbr.rel (%p439) target = $region20
        $region19: #{tpu_custom_call.1} parent=11 // pred_region
          %443 = vsyncadd [#allocation8], 0
          %s445 = sshll.u32 %s1, 4
          %s446 = int_to_ptr.hbm [resolvable:$true] %s445
          %s447 = sshll.u32 [#allocation7], 4
          %s448 = int_to_ptr.vmem [resolvable:$true] %s447
          %450 = dma.hbm_to_vmem [thread:$0]  %s446, 256, %s448, [#allocation8]
        $region20: #{tpu_custom_call.1} parent=11 // pred_fallthru
          _
        // Predicated region
        $region21: #{tpu_custom_call.1} parent=11 // pred_check
          %p451 = pneg %p100
        $region22: #{tpu_custom_call.1} parent=11 // pred_check_branch
          %453 = sbr.rel (%p451) target = $region24
        $region23: #{tpu_custom_call.1} parent=11 // pred_region
          %455 = vsyncadd [#allocation11], 0
          %s457 = sshll.u32 %s2, 4
          %s458 = int_to_ptr.hbm [resolvable:$true] %s457
          %s459 = sshll.u32 [#allocation10], 4
          %s460 = int_to_ptr.vmem [resolvable:$true] %s459
          %462 = dma.hbm_to_vmem [thread:$0]  %s458, 128, %s460, [#allocation11]
        $region24: #{tpu_custom_call.1} parent=11 // pred_fallthru
          _
        // Predicated region
        $region25: #{tpu_custom_call.1} parent=11 // pred_check
          %p463 = pneg %p155
        $region26: #{tpu_custom_call.1} parent=11 // pred_check_branch
          %465 = sbr.rel (%p463) target = $region28
        $region27: #{tpu_custom_call.1} parent=11 // pred_region
          _
        $region28: #{tpu_custom_call.1} parent=11 // pred_fallthru
          _
        // Predicated region
        $region29: #{tpu_custom_call.1} parent=11 // pred_check
          %p466 = pneg %p176
        $region30: #{tpu_custom_call.1} parent=11 // pred_check_branch
          %468 = sbr.rel (%p466) target = $region32
        $region31: #{tpu_custom_call.1} parent=11 // pred_region
          _
        $region32: #{tpu_custom_call.1} parent=11 // pred_fallthru
          _
        // Predicated region
        $region33: #{tpu_custom_call.1} parent=11 // pred_check
          %p469 = pneg %p229
        $region34: #{tpu_custom_call.1} parent=11 // pred_check_branch
          %471 = sbr.rel (%p469) target = $region36
        $region35: #{tpu_custom_call.1} parent=11 // pred_region
          _
        $region36: #{tpu_custom_call.1} parent=11 // pred_fallthru
          _
        // Predicated region
        $region37: #{tpu_custom_call.1} parent=11 // pred_check
          %p472 = pneg %p250
        $region38: #{tpu_custom_call.1} parent=11 // pred_check_branch
          %474 = sbr.rel (%p472) target = $region40
        $region39: #{tpu_custom_call.1} parent=11 // pred_region
          _
        $region40: #{tpu_custom_call.1} parent=11 // pred_fallthru
          _
        // Predicated region
        $region41: #{tpu_custom_call.1} parent=11 // pred_check
          %p475 = pneg %p305
        $region42: #{tpu_custom_call.1} parent=11 // pred_check_branch
          %477 = sbr.rel (%p475) target = $region44
        $region43: #{tpu_custom_call.1} parent=11 // pred_region
          _
        $region44: #{tpu_custom_call.1} parent=11 // pred_fallthru
          _
        // Predicated region
        $region45: #{tpu_custom_call.1} parent=11 // pred_check
          %p478 = pneg %p326
        $region46: #{tpu_custom_call.1} parent=11 // pred_check_branch
          %480 = sbr.rel (%p478) target = $region48
        $region47: #{tpu_custom_call.1} parent=11 // pred_region
          _
        $region48: #{tpu_custom_call.1} parent=11 // pred_fallthru
          _
        // Predicated region
        $region49: #{tpu_custom_call.1} parent=11 // pred_check
          %p481 = pneg %p379
        $region50: #{tpu_custom_call.1} parent=11 // pred_check_branch
          %483 = sbr.rel (%p481) target = $region52
        $region51: #{tpu_custom_call.1} parent=11 // pred_region
          _
        $region52: #{tpu_custom_call.1} parent=11 // pred_fallthru
          _
        // Predicated region
        $region53: #{tpu_custom_call.1} parent=11 // pred_check
          %p484 = pneg %p400
        $region54: #{tpu_custom_call.1} parent=11 // pred_check_branch
          %486 = sbr.rel (%p484) target = $region56
        $region55: #{tpu_custom_call.1} parent=11 // pred_region
          _
        $region56: #{tpu_custom_call.1} parent=11 // pred_fallthru
          _
      $region12: #{tpu_custom_call.1} parent=5 // pred_fallthru
        _
      %p487 = scmp.lt.s32.totalorder %s25, 4
      // Predicated region
      $region57: #{tpu_custom_call.1} parent=5 // pred_check
        %p488 = pneg %p487
      $region58: #{tpu_custom_call.1} parent=5 // pred_check_branch
        %490 = sbr.rel (%p488) target = $region60
      $region59: #{tpu_custom_call.1} parent=5 // pred_region
        // Predicated region
        $region61: #{tpu_custom_call.1} parent=59 // pred_check
          %p491 = pneg %p128
        $region62: #{tpu_custom_call.1} parent=59 // pred_check_branch
          %493 = sbr.rel (%p491) target = $region64
        $region63: #{tpu_custom_call.1} parent=59 // pred_region
          %s494 = sand.u32 %s25, 1
          %s495 = scalar_lea.sflag [#allocation8], %s494
          %s496 = sand.u32 %s118, 1
          %s497 = smul.addr %s496, 32
          %s498 = scalar_lea.vmem [#allocation12], %s497
          %s499 = smul.u32 %s32, 2
          %s500 = sadd.s32 %s33, %s499
          %p501 = scmp.lt.s32.totalorder %s500, 1
          %s502 = scalar_select %p501, %s500, 1
          %s503 = smul.u32 4, %s502
          %505 = vsyncadd %s495, 0
          %s506 = smul.addr %s503, 8
          %s507 = scalar_lea.hbm %s3, %s506
          %s508 = sshll.u32 %s507, 4
          %s509 = int_to_ptr.hbm [resolvable:$true] %s508
          %s510 = sshll.u32 %s498, 4
          %s511 = int_to_ptr.vmem [resolvable:$true] %s510
          %516 = dma.hbm_to_vmem [thread:$0]  %s509, 512, %s511, %s495, 128, 128, 8
        $region64: #{tpu_custom_call.1} parent=59 // pred_fallthru
          _
        // Predicated region
        $region65: #{tpu_custom_call.1} parent=59 // pred_check
          %p517 = pneg %p202
        $region66: #{tpu_custom_call.1} parent=59 // pred_check_branch
          %519 = sbr.rel (%p517) target = $region68
        $region67: #{tpu_custom_call.1} parent=59 // pred_region
          %s520 = sand.u32 %s25, 1
          %s521 = scalar_lea.sflag [#allocation8], %s520
          %s522 = sand.u32 %s192, 1
          %s523 = smul.addr %s522, 32
          %s524 = scalar_lea.vmem [#allocation13], %s523
          %s525 = smul.u32 %s33, %s32
          %p526 = scmp.lt.s32.totalorder %s525, 0
          %s527 = scalar_select %p526, %s525, 0
          %s528 = smul.u32 4, %s527
          %530 = vsyncadd %s521, 0
          %s531 = smul.addr %s528, 8
          %s532 = scalar_lea.hbm %s6, %s531
          %s533 = sshll.u32 %s532, 4
          %s534 = int_to_ptr.hbm [resolvable:$true] %s533
          %s535 = sshll.u32 %s524, 4
          %s536 = int_to_ptr.vmem [resolvable:$true] %s535
          %541 = dma.hbm_to_vmem [thread:$0]  %s534, 512, %s536, %s521, 128, 128, 8
        $region68: #{tpu_custom_call.1} parent=59 // pred_fallthru
          _
        // Predicated region
        $region69: #{tpu_custom_call.1} parent=59 // pred_check
          %p542 = pneg %p278
        $region70: #{tpu_custom_call.1} parent=59 // pred_check_branch
          %544 = sbr.rel (%p542) target = $region72
        $region71: #{tpu_custom_call.1} parent=59 // pred_region
          %s545 = sand.u32 %s25, 1
          %s546 = scalar_lea.sflag [#allocation8], %s545
          %s547 = sand.u32 %s268, 1
          %s548 = smul.addr %s547, 32
          %s549 = scalar_lea.vmem [#allocation14], %s548
          %s550 = smul.u32 %s32, 2
          %s551 = sadd.s32 %s33, %s550
          %p552 = scmp.lt.s32.totalorder %s551, 0
          %s553 = scalar_select %p552, %s551, 0
          %s554 = smul.u32 4, %s553
          %556 = vsyncadd %s546, 0
          %s557 = smul.addr %s554, 8
          %s558 = scalar_lea.hbm %s9, %s557
          %s559 = sshll.u32 %s558, 4
          %s560 = int_to_ptr.hbm [resolvable:$true] %s559
          %s561 = sshll.u32 %s549, 4
          %s562 = int_to_ptr.vmem [resolvable:$true] %s561
          %567 = dma.hbm_to_vmem [thread:$0]  %s560, 512, %s562, %s546, 128, 128, 8
        $region72: #{tpu_custom_call.1} parent=59 // pred_fallthru
          _
        // Predicated region
        $region73: #{tpu_custom_call.1} parent=59 // pred_check
          %p568 = pneg %p352
        $region74: #{tpu_custom_call.1} parent=59 // pred_check_branch
          %570 = sbr.rel (%p568) target = $region76
        $region75: #{tpu_custom_call.1} parent=59 // pred_region
          %s571 = sand.u32 %s25, 1
          %s572 = scalar_lea.sflag [#allocation8], %s571
          %s573 = sand.u32 %s342, 1
          %s574 = smul.addr %s573, 32
          %s575 = scalar_lea.vmem [#allocation15], %s574
          %s576 = smul.u32 %s33, %s32
          %p577 = scmp.lt.s32.totalorder %s576, 0
          %s578 = scalar_select %p577, %s576, 0
          %s579 = smul.u32 4, %s578
          %581 = vsyncadd %s572, 0
          %s582 = smul.addr %s579, 8
          %s583 = scalar_lea.hbm %s12, %s582
          %s584 = sshll.u32 %s583, 4
          %s585 = int_to_ptr.hbm [resolvable:$true] %s584
          %s586 = sshll.u32 %s575, 4
          %s587 = int_to_ptr.vmem [resolvable:$true] %s586
          %592 = dma.hbm_to_vmem [thread:$0]  %s585, 512, %s587, %s572, 128, 128, 8
        $region76: #{tpu_custom_call.1} parent=59 // pred_fallthru
          _
      $region60: #{tpu_custom_call.1} parent=5 // pred_fallthru
        _
      %p593 = scmp.le.s32.totalorder 1, %s25
      %p594 = scmp.lt.s32.totalorder %s25, 5
      %p595 = pnand %p593, %p594
      %p596 = pneg %p595
      // Predicated region
      $region77: #{tpu_custom_call.1} parent=5 // pred_check
        _
      $region78: #{tpu_custom_call.1} parent=5 // pred_check_branch
        %598 = sbr.rel (%p595) target = $region80
      $region79: #{tpu_custom_call.1} parent=5 // pred_region
        %s599 = ssub.s32 %s25, 1
        // Predicated region
        $region81: #{tpu_custom_call.1} parent=79 // pred_check
          %p600 = pneg %p79
        $region82: #{tpu_custom_call.1} parent=79 // pred_check_branch
          %602 = sbr.rel (%p600) target = $region84
        $region83: #{tpu_custom_call.1} parent=79 // pred_region
          %604 = dma.done [#allocation8], 256
        $region84: #{tpu_custom_call.1} parent=79 // pred_fallthru
          _
        // Predicated region
        $region85: #{tpu_custom_call.1} parent=79 // pred_check
          %p605 = pneg %p100
        $region86: #{tpu_custom_call.1} parent=79 // pred_check_branch
          %607 = sbr.rel (%p605) target = $region88
        $region87: #{tpu_custom_call.1} parent=79 // pred_region
          %609 = dma.done [#allocation11], 128
        $region88: #{tpu_custom_call.1} parent=79 // pred_fallthru
          _
        %s610 = sand.u32 %s30, 1
        %s611 = scalar_lea.sflag [#allocation8], %s610
        %s612 = sand.u32 %s121, 1
        %s613 = smul.addr %s612, 32
        %s614 = scalar_lea.vmem [#allocation12], %s613
        // Predicated region
        $region89: #{tpu_custom_call.1} parent=79 // pred_check
          %p615 = pneg %p134
        $region90: #{tpu_custom_call.1} parent=79 // pred_check_branch
          %617 = sbr.rel (%p615) target = $region92
        $region91: #{tpu_custom_call.1} parent=79 // pred_region
          %619 = dma.done %s611, 512
        $region92: #{tpu_custom_call.1} parent=79 // pred_fallthru
          _
        %s620 = sand.u32 %s30, 1
        %s621 = scalar_lea.sflag [#allocation8], %s620
        %s622 = sand.u32 %s195, 1
        %s623 = smul.addr %s622, 32
        %s624 = scalar_lea.vmem [#allocation13], %s623
        // Predicated region
        $region93: #{tpu_custom_call.1} parent=79 // pred_check
          %p625 = pneg %p208
        $region94: #{tpu_custom_call.1} parent=79 // pred_check_branch
          %627 = sbr.rel (%p625) target = $region96
        $region95: #{tpu_custom_call.1} parent=79 // pred_region
          %629 = dma.done %s621, 512
        $region96: #{tpu_custom_call.1} parent=79 // pred_fallthru
          _
        %s630 = sand.u32 %s30, 1
        %s631 = scalar_lea.sflag [#allocation8], %s630
        %s632 = sand.u32 %s271, 1
        %s633 = smul.addr %s632, 32
        %s634 = scalar_lea.vmem [#allocation14], %s633
        // Predicated region
        $region97: #{tpu_custom_call.1} parent=79 // pred_check
          %p635 = pneg %p284
        $region98: #{tpu_custom_call.1} parent=79 // pred_check_branch
          %637 = sbr.rel (%p635) target = $region100
        $region99: #{tpu_custom_call.1} parent=79 // pred_region
          %639 = dma.done %s631, 512
        $region100: #{tpu_custom_call.1} parent=79 // pred_fallthru
          _
        %s640 = sand.u32 %s30, 1
        %s641 = scalar_lea.sflag [#allocation8], %s640
        %s642 = sand.u32 %s345, 1
        %s643 = smul.addr %s642, 32
        %s644 = scalar_lea.vmem [#allocation15], %s643
        // Predicated region
        $region101: #{tpu_custom_call.1} parent=79 // pred_check
          %p645 = pneg %p358
        $region102: #{tpu_custom_call.1} parent=79 // pred_check_branch
          %647 = sbr.rel (%p645) target = $region104
        $region103: #{tpu_custom_call.1} parent=79 // pred_region
          %649 = dma.done %s641, 512
        $region104: #{tpu_custom_call.1} parent=79 // pred_fallthru
          _
        %p650 = pneg %p58
        %p651 = pneg %p55
        %p652 = pneg %p79
        %p653 = pneg %p76
        %p654 = pneg %p100
        %p655 = pneg %p97
        %s656 = sand.u32 %s30, 1
        %s657 = scalar_lea.sflag [#allocation8], %s656
        %s658 = sand.u32 %s121, 1
        %s659 = smul.addr %s658, 32
        %s660 = scalar_lea.vmem [#allocation12], %s659
        %p661 = pneg %p134
        %p662 = pneg %p131
        %p663 = pneg %p155
        %p664 = pneg %p152
        %p665 = pneg %p176
        %p666 = pneg %p173
        %s667 = sand.u32 %s30, 1
        %s668 = scalar_lea.sflag [#allocation8], %s667
        %s669 = sand.u32 %s195, 1
        %s670 = smul.addr %s669, 32
        %s671 = scalar_lea.vmem [#allocation13], %s670
        %p672 = pneg %p208
        %p673 = pneg %p205
        %p674 = pneg %p229
        %p675 = pneg %p226
        %p676 = pneg %p250
        %p677 = pneg %p247
        %s678 = sand.u32 %s30, 1
        %s679 = scalar_lea.sflag [#allocation8], %s678
        %s680 = sand.u32 %s271, 1
        %s681 = smul.addr %s680, 32
        %s682 = scalar_lea.vmem [#allocation14], %s681
        %p683 = pneg %p284
        %p684 = pneg %p281
        %p685 = pneg %p305
        %p686 = pneg %p302
        %p687 = pneg %p326
        %p688 = pneg %p323
        %s689 = sand.u32 %s30, 1
        %s690 = scalar_lea.sflag [#allocation8], %s689
        %s691 = sand.u32 %s345, 1
        %s692 = smul.addr %s691, 32
        %s693 = scalar_lea.vmem [#allocation15], %s692
        %p694 = pneg %p358
        %p695 = pneg %p355
        %p696 = pneg %p379
        %p697 = pneg %p376
        %p698 = pneg %p400
        %p699 = pneg %p397
        %p700 = pneg %p421
        %p701 = pneg %p418
        %s702 = smul.u32 %s34, 2
        %s703 = sadd.s32 %s35, %s702
        %p704 = scmp.lt.s32.totalorder %s703, 1
        %s705 = scalar_select %p704, %s703, 1
        %s706 = smul.u32 4, %s705
        %s707 = smul.u32 %s35, %s34
        %p708 = scmp.lt.s32.totalorder %s707, 0
        %s709 = scalar_select %p708, %s707, 0
        %s710 = smul.u32 4, %s709
        %s711 = smul.u32 %s34, 2
        %s712 = sadd.s32 %s35, %s711
        %p713 = scmp.lt.s32.totalorder %s712, 0
        %s714 = scalar_select %p713, %s712, 0
        %s715 = smul.u32 4, %s714
        %s716 = smul.u32 %s35, %s34
        %p717 = scmp.lt.s32.totalorder %s716, 0
        %s718 = scalar_select %p717, %s716, 0
        %s719 = smul.u32 4, %s718
        %p720 = scmp.eq.s32.totalorder %s34, 0
        %p721 = scmp.eq.s32.totalorder %s35, 0
        %p722 = pnand %p720, %p721
        %p723 = pneg %p722
        // Predicated region
        $region105: #{tpu_custom_call.1} parent=79 // pred_check
          _
        $region106: #{tpu_custom_call.1} parent=79 // pred_check_branch
          %725 = sbr.rel (%p722) target = $region108
        $region107: #{tpu_custom_call.1} parent=79 // pred_region
          %726 = vst [vmem:[#allocation2] sm:$0xff] 0.0
          %727 = vst [vmem:[#allocation3] sm:$0xff] 0.0
        $region108: #{tpu_custom_call.1} parent=79 // pred_fallthru
          _
        %p728 = scmp.lt.s32.totalorder %s35, 2
        %p729 = pnand %p720, %p728
        %p730 = pneg %p729
        // Predicated region
        $region109: #{tpu_custom_call.1} parent=79 // pred_check
          _
        $region110: #{tpu_custom_call.1} parent=79 // pred_check_branch
          %732 = sbr.rel (%p729) target = $region112
        $region111: #{tpu_custom_call.1} parent=79 // pred_region
          %s733 = smul.u32 %s35, 128
          %s734 = sshra.s32 %s733, 7
          %s735 = sand.u32 %s733, 127
          %s736 = smul.addr %s734, 8
          %s737 = scalar_lea.vmem [#allocation7], %s736
          %v738 = vld [vmem:[%s737] sm:$0xff]
          %v739 = vpack.c.bf16 %v738, %v738
          %v740 = vld [vmem:[#allocation2] sm:$0xff]
          %v741 = vld [vmem:[%s614] sm:$0xff]
          %v742 = vld [vmem:[%s614 + $0x8] sm:$0xff]
          %v743 = vld [vmem:[%s614 + $0x10] sm:$0xff]
          %v744 = vld [vmem:[%s614 + $0x18] sm:$0xff]
          %v745 = vunpack.c.0.s8 %v741
          %v746 = vunpack.c.1.s8 %v741
          %v747 = vunpack.c.2.s8 %v741
          %v748 = vunpack.c.3.s8 %v741
          %v749 = vunpack.c.0.s8 %v742
          %v750 = vunpack.c.1.s8 %v742
          %v751 = vunpack.c.2.s8 %v742
          %v752 = vunpack.c.3.s8 %v742
          %v753 = vunpack.c.0.s8 %v743
          %v754 = vunpack.c.1.s8 %v743
          %v755 = vunpack.c.2.s8 %v743
          %v756 = vunpack.c.3.s8 %v743
          %v757 = vunpack.c.0.s8 %v744
          %v758 = vunpack.c.1.s8 %v744
          %v759 = vunpack.c.2.s8 %v744
          %v760 = vunpack.c.3.s8 %v744
          %v761 = vcvt.s32.f32 %v745
          %v762 = vcvt.s32.f32 %v746
          %v763 = vcvt.s32.f32 %v747
          %v764 = vcvt.s32.f32 %v748
          %v765 = vcvt.s32.f32 %v749
          %v766 = vcvt.s32.f32 %v750
          %v767 = vcvt.s32.f32 %v751
          %v768 = vcvt.s32.f32 %v752
          %v769 = vcvt.s32.f32 %v753
          %v770 = vcvt.s32.f32 %v754
          %v771 = vcvt.s32.f32 %v755
          %v772 = vcvt.s32.f32 %v756
          %v773 = vcvt.s32.f32 %v757
          %v774 = vcvt.s32.f32 %v758
          %v775 = vcvt.s32.f32 %v759
          %v776 = vcvt.s32.f32 %v760
          %v777 = vpack.c.bf16 %v762, %v761
          %v778 = vpack.c.bf16 %v764, %v763
          %v779 = vpack.c.bf16 %v766, %v765
          %v780 = vpack.c.bf16 %v768, %v767
          %v781 = vpack.c.bf16 %v770, %v769
          %v782 = vpack.c.bf16 %v772, %v771
          %v783 = vpack.c.bf16 %v774, %v773
          %v784 = vpack.c.bf16 %v776, %v775
          %785 = vmatpush.bf16.msra.mxu0 %v784
          %786 = vmatpush.bf16.msra.mxu0 %v783
          %787 = vmatpush.bf16.msra.mxu0 %v782
          %788 = vmatpush.bf16.msra.mxu0 %v781
          %789 = vmatpush.bf16.msra.mxu0 %v780
          %790 = vmatpush.bf16.msra.mxu0 %v779
          %791 = vmatpush.bf16.msra.mxu0 %v778
          %792 = vmatpush.bf16.msra.mxu0 %v777
          %793 = vmatmul.bf16.gmra.mxu0 %v739
          %v794 = vpop.f32.mrf.mxu0
          %v795 = vadd.f32 0.0, %v794
          %v796 = vpop.f32.mrf.mxu0
          %797 = vdwg.mxu0
          %v798 = vadd.f32 %v740, %v795
          %799 = vst [vmem:[#allocation2] sm:$0xff] %v798
        $region112: #{tpu_custom_call.1} parent=79 // pred_fallthru
          _
        %p800 = scmp.lt.s32.totalorder %s35, 1
        %p801 = pnand %p720, %p800
        %p802 = pneg %p801
        // Predicated region
        $region113: #{tpu_custom_call.1} parent=79 // pred_check
          _
        $region114: #{tpu_custom_call.1} parent=79 // pred_check_branch
          %804 = sbr.rel (%p801) target = $region116
        $region115: #{tpu_custom_call.1} parent=79 // pred_region
          %s805 = smul.u32 %s35, 128
          %s806 = sshra.s32 %s805, 7
          %s807 = sand.u32 %s805, 127
          %s808 = scalar_lea.vmem [#allocation10], %s806
          %v809 = vld [vmem:[%s808] sm:$0xff]
          %v810 = vpack.c.bf16 %v809, %v809
          %v811 = vld [vmem:[#allocation3] sm:$0xff]
          %v812 = vld [vmem:[%s634] sm:$0xff]
          %v813 = vld [vmem:[%s634 + $0x8] sm:$0xff]
          %v814 = vld [vmem:[%s634 + $0x10] sm:$0xff]
          %v815 = vld [vmem:[%s634 + $0x18] sm:$0xff]
          %v816 = vunpack.c.0.s8 %v812
          %v817 = vunpack.c.1.s8 %v812
          %v818 = vunpack.c.2.s8 %v812
          %v819 = vunpack.c.3.s8 %v812
          %v820 = vunpack.c.0.s8 %v813
          %v821 = vunpack.c.1.s8 %v813
          %v822 = vunpack.c.2.s8 %v813
          %v823 = vunpack.c.3.s8 %v813
          %v824 = vunpack.c.0.s8 %v814
          %v825 = vunpack.c.1.s8 %v814
          %v826 = vunpack.c.2.s8 %v814
          %v827 = vunpack.c.3.s8 %v814
          %v828 = vunpack.c.0.s8 %v815
          %v829 = vunpack.c.1.s8 %v815
          %v830 = vunpack.c.2.s8 %v815
          %v831 = vunpack.c.3.s8 %v815
          %v832 = vcvt.s32.f32 %v816
          %v833 = vcvt.s32.f32 %v817
          %v834 = vcvt.s32.f32 %v818
          %v835 = vcvt.s32.f32 %v819
          %v836 = vcvt.s32.f32 %v820
          %v837 = vcvt.s32.f32 %v821
          %v838 = vcvt.s32.f32 %v822
          %v839 = vcvt.s32.f32 %v823
          %v840 = vcvt.s32.f32 %v824
          %v841 = vcvt.s32.f32 %v825
          %v842 = vcvt.s32.f32 %v826
          %v843 = vcvt.s32.f32 %v827
          %v844 = vcvt.s32.f32 %v828
          %v845 = vcvt.s32.f32 %v829
          %v846 = vcvt.s32.f32 %v830
          %v847 = vcvt.s32.f32 %v831
          %v848 = vpack.c.bf16 %v833, %v832
          %v849 = vpack.c.bf16 %v835, %v834
          %v850 = vpack.c.bf16 %v837, %v836
          %v851 = vpack.c.bf16 %v839, %v838
          %v852 = vpack.c.bf16 %v841, %v840
          %v853 = vpack.c.bf16 %v843, %v842
          %v854 = vpack.c.bf16 %v845, %v844
          %v855 = vpack.c.bf16 %v847, %v846
          %856 = vmatpush.bf16.msra.mxu0 %v855
          %857 = vmatpush.bf16.msra.mxu0 %v854
          %858 = vmatpush.bf16.msra.mxu0 %v853
          %859 = vmatpush.bf16.msra.mxu0 %v852
          %860 = vmatpush.bf16.msra.mxu0 %v851
          %861 = vmatpush.bf16.msra.mxu0 %v850
          %862 = vmatpush.bf16.msra.mxu0 %v849
          %863 = vmatpush.bf16.msra.mxu0 %v848
          %864 = vmatmul.bf16.gmra.mxu0 %v810
          %v865 = vpop.f32.mrf.mxu0
          %v866 = vadd.f32 0.0, %v865
          %v867 = vpop.f32.mrf.mxu0
          %868 = vdwg.mxu0
          %v869 = vadd.f32 %v811, %v866
          %870 = vst [vmem:[#allocation3] sm:$0xff] %v869
        $region116: #{tpu_custom_call.1} parent=79 // pred_fallthru
          _
        %p871 = scmp.eq.s32.totalorder %s34, 1
        %p872 = pnand %p871, %p721
        %p873 = pneg %p872
        // Predicated region
        $region117: #{tpu_custom_call.1} parent=79 // pred_check
          _
        $region118: #{tpu_custom_call.1} parent=79 // pred_check_branch
          %875 = sbr.rel (%p872) target = $region120
        $region119: #{tpu_custom_call.1} parent=79 // pred_region
          %v876 = vld [vmem:[#allocation2] sm:$0xff]
          %v877 = vld [vmem:[%s4] sm:$0x1]
          %v879 = vperm.slane %v877, 0
          %v881 = vmul.f32 %v876, %v879
          %v882 = vld [vmem:[%s5] sm:$0x1]
          %v884 = vperm.slane %v882, 0
          %v886 = vadd.f32 %v881, %v884
          %v887 = vmax.f32 %v886, 0.0
          %v888 = vpack.c.bf16 %v887, %v887
          %889 = vst [vmem:[#allocation4] sm:$0xf] %v888
          %v890 = vld [vmem:[#allocation3] sm:$0xff]
          %v891 = vld [vmem:[%s10] sm:$0x1]
          %v893 = vperm.slane %v891, 0
          %v895 = vmul.f32 %v890, %v893
          %v896 = vld [vmem:[%s11] sm:$0x1]
          %v898 = vperm.slane %v896, 0
          %v900 = vadd.f32 %v895, %v898
          %v901 = vmax.f32 %v900, 0.0
          %v902 = vpack.c.bf16 %v901, %v901
          %903 = vst [vmem:[#allocation5] sm:$0xf] %v902
          %904 = vst [vmem:[#allocation2] sm:$0xff] 0.0
          %905 = vst [vmem:[#allocation3] sm:$0xff] 0.0
        $region120: #{tpu_custom_call.1} parent=79 // pred_fallthru
          _
        %p906 = pnand %p871, %p800
        %p907 = pneg %p906
        // Predicated region
        $region121: #{tpu_custom_call.1} parent=79 // pred_check
          _
        $region122: #{tpu_custom_call.1} parent=79 // pred_check_branch
          %909 = sbr.rel (%p906) target = $region124
        $region123: #{tpu_custom_call.1} parent=79 // pred_region
          %s910 = smul.u32 %s35, 128
          %v911 = vld [vmem:[#allocation2] sm:$0xff]
          %s912 = sshra.s32 %s910, 7
          %s913 = sand.u32 %s910, 127
          %s914 = smul.addr %s912, 4
          %s915 = scalar_lea.vmem [#allocation4], %s914
          %v916 = vld [vmem:[%s915] sm:$0xf]
          %v917 = vld [vmem:[%s624] sm:$0xff]
          %v918 = vld [vmem:[%s624 + $0x8] sm:$0xff]
          %v919 = vld [vmem:[%s624 + $0x10] sm:$0xff]
          %v920 = vld [vmem:[%s624 + $0x18] sm:$0xff]
          %v921 = vunpack.c.0.s8 %v917
          %v922 = vunpack.c.1.s8 %v917
          %v923 = vunpack.c.2.s8 %v917
          %v924 = vunpack.c.3.s8 %v917
          %v925 = vunpack.c.0.s8 %v918
          %v926 = vunpack.c.1.s8 %v918
          %v927 = vunpack.c.2.s8 %v918
          %v928 = vunpack.c.3.s8 %v918
          %v929 = vunpack.c.0.s8 %v919
          %v930 = vunpack.c.1.s8 %v919
          %v931 = vunpack.c.2.s8 %v919
          %v932 = vunpack.c.3.s8 %v919
          %v933 = vunpack.c.0.s8 %v920
          %v934 = vunpack.c.1.s8 %v920
          %v935 = vunpack.c.2.s8 %v920
          %v936 = vunpack.c.3.s8 %v920
          %v937 = vcvt.s32.f32 %v921
          %v938 = vcvt.s32.f32 %v922
          %v939 = vcvt.s32.f32 %v923
          %v940 = vcvt.s32.f32 %v924
          %v941 = vcvt.s32.f32 %v925
          %v942 = vcvt.s32.f32 %v926
          %v943 = vcvt.s32.f32 %v927
          %v944 = vcvt.s32.f32 %v928
          %v945 = vcvt.s32.f32 %v929
          %v946 = vcvt.s32.f32 %v930
          %v947 = vcvt.s32.f32 %v931
          %v948 = vcvt.s32.f32 %v932
          %v949 = vcvt.s32.f32 %v933
          %v950 = vcvt.s32.f32 %v934
          %v951 = vcvt.s32.f32 %v935
          %v952 = vcvt.s32.f32 %v936
          %v953 = vpack.c.bf16 %v938, %v937
          %v954 = vpack.c.bf16 %v940, %v939
          %v955 = vpack.c.bf16 %v942, %v941
          %v956 = vpack.c.bf16 %v944, %v943
          %v957 = vpack.c.bf16 %v946, %v945
          %v958 = vpack.c.bf16 %v948, %v947
          %v959 = vpack.c.bf16 %v950, %v949
          %v960 = vpack.c.bf16 %v952, %v951
          %961 = vmatpush.bf16.msra.mxu0 %v960
          %962 = vmatpush.bf16.msra.mxu0 %v959
          %963 = vmatpush.bf16.msra.mxu0 %v958
          %964 = vmatpush.bf16.msra.mxu0 %v957
          %965 = vmatpush.bf16.msra.mxu0 %v956
          %966 = vmatpush.bf16.msra.mxu0 %v955
          %967 = vmatpush.bf16.msra.mxu0 %v954
          %968 = vmatpush.bf16.msra.mxu0 %v953
          %969 = vmatmul.bf16.gmra.mxu0 %v916
          %v970 = vpop.f32.mrf.mxu0
          %v971 = vadd.f32 0.0, %v970
          %v972 = vpop.f32.mrf.mxu0
          %973 = vdwg.mxu0
          %v974 = vadd.f32 %v911, %v971
          %975 = vst [vmem:[#allocation2] sm:$0xff] %v974
          %v976 = vld [vmem:[#allocation3] sm:$0xff]
          %s977 = smul.addr %s912, 4
          %s978 = scalar_lea.vmem [#allocation5], %s977
          %v979 = vld [vmem:[%s978] sm:$0xf]
          %v980 = vld [vmem:[%s644] sm:$0xff]
          %v981 = vld [vmem:[%s644 + $0x8] sm:$0xff]
          %v982 = vld [vmem:[%s644 + $0x10] sm:$0xff]
          %v983 = vld [vmem:[%s644 + $0x18] sm:$0xff]
          %v984 = vunpack.c.0.s8 %v980
          %v985 = vunpack.c.1.s8 %v980
          %v986 = vunpack.c.2.s8 %v980
          %v987 = vunpack.c.3.s8 %v980
          %v988 = vunpack.c.0.s8 %v981
          %v989 = vunpack.c.1.s8 %v981
          %v990 = vunpack.c.2.s8 %v981
          %v991 = vunpack.c.3.s8 %v981
          %v992 = vunpack.c.0.s8 %v982
          %v993 = vunpack.c.1.s8 %v982
          %v994 = vunpack.c.2.s8 %v982
          %v995 = vunpack.c.3.s8 %v982
          %v996 = vunpack.c.0.s8 %v983
          %v997 = vunpack.c.1.s8 %v983
          %v998 = vunpack.c.2.s8 %v983
          %v999 = vunpack.c.3.s8 %v983
          %v1000 = vcvt.s32.f32 %v984
          %v1001 = vcvt.s32.f32 %v985
          %v1002 = vcvt.s32.f32 %v986
          %v1003 = vcvt.s32.f32 %v987
          %v1004 = vcvt.s32.f32 %v988
          %v1005 = vcvt.s32.f32 %v989
          %v1006 = vcvt.s32.f32 %v990
          %v1007 = vcvt.s32.f32 %v991
          %v1008 = vcvt.s32.f32 %v992
          %v1009 = vcvt.s32.f32 %v993
          %v1010 = vcvt.s32.f32 %v994
          %v1011 = vcvt.s32.f32 %v995
          %v1012 = vcvt.s32.f32 %v996
          %v1013 = vcvt.s32.f32 %v997
          %v1014 = vcvt.s32.f32 %v998
          %v1015 = vcvt.s32.f32 %v999
          %v1016 = vpack.c.bf16 %v1001, %v1000
          %v1017 = vpack.c.bf16 %v1003, %v1002
          %v1018 = vpack.c.bf16 %v1005, %v1004
          %v1019 = vpack.c.bf16 %v1007, %v1006
          %v1020 = vpack.c.bf16 %v1009, %v1008
          %v1021 = vpack.c.bf16 %v1011, %v1010
          %v1022 = vpack.c.bf16 %v1013, %v1012
          %v1023 = vpack.c.bf16 %v1015, %v1014
          %1024 = vmatpush.bf16.msra.mxu0 %v1023
          %1025 = vmatpush.bf16.msra.mxu0 %v1022
          %1026 = vmatpush.bf16.msra.mxu0 %v1021
          %1027 = vmatpush.bf16.msra.mxu0 %v1020
          %1028 = vmatpush.bf16.msra.mxu0 %v1019
          %1029 = vmatpush.bf16.msra.mxu0 %v1018
          %1030 = vmatpush.bf16.msra.mxu0 %v1017
          %1031 = vmatpush.bf16.msra.mxu0 %v1016
          %1032 = vmatmul.bf16.gmra.mxu0 %v979
          %v1033 = vpop.f32.mrf.mxu0
          %v1034 = vadd.f32 0.0, %v1033
          %v1035 = vpop.f32.mrf.mxu0
          %1036 = vdwg.mxu0
          %v1037 = vadd.f32 %v976, %v1034
          %1038 = vst [vmem:[#allocation3] sm:$0xff] %v1037
        $region124: #{tpu_custom_call.1} parent=79 // pred_fallthru
          _
        %p1039 = scmp.eq.s32.totalorder %s35, 1
        %p1040 = pnand %p871, %p1039
        %p1041 = pneg %p1040
        // Predicated region
        $region125: #{tpu_custom_call.1} parent=79 // pred_check
          _
        $region126: #{tpu_custom_call.1} parent=79 // pred_check_branch
          %1043 = sbr.rel (%p1040) target = $region128
        $region127: #{tpu_custom_call.1} parent=79 // pred_region
          %v1044 = vld [vmem:[#allocation2] sm:$0xff]
          %v1045 = vld [vmem:[%s7] sm:$0x1]
          %v1047 = vperm.slane %v1045, 0
          %v1049 = vmul.f32 %v1044, %v1047
          %v1050 = vld [vmem:[%s8] sm:$0x1]
          %v1052 = vperm.slane %v1050, 0
          %v1054 = vadd.f32 %v1049, %v1052
          %v1055 = vld [vmem:[#allocation3] sm:$0xff]
          %v1056 = vld [vmem:[%s13] sm:$0x1]
          %v1058 = vperm.slane %v1056, 0
          %v1060 = vmul.f32 %v1055, %v1058
          %v1061 = vld [vmem:[%s14] sm:$0x1]
          %v1063 = vperm.slane %v1061, 0
          %v1065 = vadd.f32 %v1060, %v1063
          %v1066 = vmul.f32 %v1054, %v1054
          %1067 = vadd.xlane.f32.xlu0 %v1066
          %v1068 = vpop.xlane.xlu0 %1067
          %v1069 = vmax.f32 %v1068, 1e-24
          %v1070 = vrsqrt.pop %v1069
          %v1071 = vmul.f32 %v1070, %v1069
          %v1072 = vmul.f32 %v1071, %v1070
          %v1073 = vmul.f32 0.5, %v1072
          %v1074 = vsub.f32 1.5, %v1073
          %v1075 = vmul.f32 %v1070, %v1074
          %vm1076 = vweird.f32 %v1069
          %vm1077 = vweird.f32 %v1070
          %vm1078 = vmor %vm1076, %vm1077
          %v1079 = vsel %vm1078, %v1070, %v1075
          %v1080 = vmul.f32 %v1065, %v1065
          %1081 = vadd.xlane.f32.xlu0 %v1080
          %v1082 = vpop.xlane.xlu0 %1081
          %v1083 = vmax.f32 %v1082, 1e-24
          %v1084 = vrsqrt.pop %v1083
          %v1085 = vmul.f32 %v1084, %v1083
          %v1086 = vmul.f32 %v1085, %v1084
          %v1087 = vmul.f32 0.5, %v1086
          %v1088 = vsub.f32 1.5, %v1087
          %v1089 = vmul.f32 %v1084, %v1088
          %vm1090 = vweird.f32 %v1083
          %vm1091 = vweird.f32 %v1084
          %vm1092 = vmor %vm1090, %vm1091
          %v1093 = vsel %vm1092, %v1084, %v1089
          %s1094 = sld [smem:[#allocation6]]
          %v1095 = vstv %s1094
          %v1096 = vmul.f32 %v1079, %v1095
          %v1097 = vmul.f32 %v1054, %v1096
          %v1098 = vmul.f32 %v1065, %v1093
          %1099 = vmatpush.xpose.msra.mxu0 0.0
          %1100 = vmatpush.xpose.msra.mxu0 0.0
          %1101 = vmatpush.xpose.msra.mxu0 0.0
          %1102 = vmatpush.xpose.msra.mxu0 0.0
          %1103 = vmatpush.xpose.msra.mxu0 0.0
          %1104 = vmatpush.xpose.msra.mxu0 0.0
          %1105 = vmatpush.xpose.msra.mxu0 0.0
          %1106 = vmatpush.xpose.msra.mxu0 0.0
          %1107 = vmatpush.xpose.msra.mxu0 0.0
          %1108 = vmatpush.xpose.msra.mxu0 0.0
          %1109 = vmatpush.xpose.msra.mxu0 0.0
          %1110 = vmatpush.xpose.msra.mxu0 0.0
          %1111 = vmatpush.xpose.msra.mxu0 0.0
          %1112 = vmatpush.xpose.msra.mxu0 0.0
          %1113 = vmatpush.xpose.msra.mxu0 0.0
          %1114 = vmatpush.xpose.msra.mxu0 %v1098
          %1115 = vmatmul.f32.gmra.mxu0 %v1097
          %v1116 = vpop.f32.mrf.mxu0
          %v1117 = vadd.f32 0.0, %v1116
          %1118 = vdwg.mxu0
          %vm1119 = vcmask 64512
          %1120 = vst.msk [vmem:[#allocation16] sm:$0xff] %vm1119, %v1117
        $region128: #{tpu_custom_call.1} parent=79 // pred_fallthru
          _
        // Predicated region
        $region129: #{tpu_custom_call.1} parent=79 // pred_check
          %p1121 = pneg %p418
        $region130: #{tpu_custom_call.1} parent=79 // pred_check_branch
          %1123 = sbr.rel (%p1121) target = $region132
        $region131: #{tpu_custom_call.1} parent=79 // pred_region
          %1125 = vsyncadd [#allocation9], 0
          %s1127 = sshll.u32 [#allocation16], 4
          %s1128 = int_to_ptr.vmem [resolvable:$true] %s1127
          %s1129 = sshll.u32 %s15, 4
          %s1130 = int_to_ptr.hbm [resolvable:$true] %s1129
          %1132 = dma.vmem_to_hbm [thread:$0]  %s1128, 128, %s1130, [#allocation9]
        $region132: #{tpu_custom_call.1} parent=79 // pred_fallthru
          _
        // Predicated region
        $region133: #{tpu_custom_call.1} parent=79 // pred_check
          %p1133 = pneg %p418
        $region134: #{tpu_custom_call.1} parent=79 // pred_check_branch
          %1135 = sbr.rel (%p1133) target = $region136
        $region135: #{tpu_custom_call.1} parent=79 // pred_region
          %1137 = dma.done [#allocation9], 128
        $region136: #{tpu_custom_call.1} parent=79 // pred_fallthru
          _
      $region80: #{tpu_custom_call.1} parent=5 // pred_fallthru
        _
      %p1138 = scmp.le.s32.totalorder 2, %s25
      // Predicated region
      $region137: #{tpu_custom_call.1} parent=5 // pred_check
        %p1139 = pneg %p1138
      $region138: #{tpu_custom_call.1} parent=5 // pred_check_branch
        %1141 = sbr.rel (%p1139) target = $region140
      $region139: #{tpu_custom_call.1} parent=5 // pred_region
        %s1142 = ssub.s32 %s25, 2
      $region140: #{tpu_custom_call.1} parent=5 // pred_fallthru
        _
    $region6: #{tpu_custom_call.1} parent=1 // loop_footer
      %s29 = sadd.s32 1, %s25
    $region7: #{tpu_custom_call.1} parent=1 // loop_footer_branch
      %24 = sbr.rel target = $region3
    $region8: #{tpu_custom_call.1} parent=1 // loop_exit
      _
    %1143 = vsyncpa [#allocation8], 1
    %s1144 = scalar_lea.sflag [#allocation8], 1
    %1145 = vsyncpa %s1144, 1
    %1146 = vsyncpa [#allocation11], 1
    %1147 = vsyncpa [#allocation9], 1
    %s1148 = scalar_lea.sflag [#allocation9], 1
    %1149 = vsyncpa %s1148, 1

</llo_original>
